<compile_context>
chip_gen: v7x
topology: tpu7x:2x2x1
jax: 0.10.0
libtpu: 0.0.40
codegen_flags: <defaults>
</compile_context>

<pallas_src>
import functools

import jax
import jax.numpy as jnp
from jax.experimental import pallas as pl
from jax.experimental.pallas import tpu as pltpu


def rnn_chunk_kernel(x_ref, h0_ref, wih_ref, whh_ref, b_ref, wout_ref, bout_ref,
                     out_ref, act_ref, h_scr, gates_scr):
    """One grid step == one (batch-block, time-chunk) tile.

    x_ref    : (B_BLK, T_CHUNK, n_in)   batch_first chunk of the input
    h0_ref   : (B_BLK, n_h)             initial hidden state for this batch block
    wih_ref  : (n_in, n_h)              W_ih^T
    whh_ref  : (n_h, n_h)               W_hh^T
    b_ref    : (1, n_h)                 bias_ih + bias_hh
    wout_ref : (n_h, n_out)             W_out^T
    bout_ref : (1, n_out)               b_out
    out_ref  : (B_BLK, T_CHUNK, n_out)  fc output chunk
    act_ref  : (B_BLK, T_CHUNK, n_h)    hidden-state (activation) chunk
    h_scr    : (B_BLK, n_h) f32         hidden state carried across time chunks
    gates_scr: (B_BLK, T_CHUNK, n_h) f32 staged input projection for this chunk
    """
    tc = pl.program_id(1)  # time-chunk index: innermost, sequential ("arbitrary")

    @pl.when(tc == 0)
    def _():
        h_scr[...] = h0_ref[...].astype(jnp.float32)

    b_blk, t_chunk, n_in = x_ref.shape
    n_h = whh_ref.shape[0]
    n_out = wout_ref.shape[1]

    # ---- (a) Input projection hoisted off the serial path: ONE MXU matmul per
    #      chunk (M = B_BLK*T_CHUNK rows), staged in VMEM scratch.
    x_flat = x_ref[...].reshape(b_blk * t_chunk, n_in)
    gates_scr[...] = (jnp.dot(x_flat, wih_ref[...],
                              preferred_element_type=jnp.float32)
                      + b_ref[...]).reshape(b_blk, t_chunk, n_h)

    # ---- (b) Serial recurrence: only h @ W_hh^T + tanh per step.  Hidden
    #      states are stored straight into the act output block (no staging).
    # TODO(synk): for production n_h, stage W_hh via pltpu.matmul_push_rhs /
    # matmul_acc_lhs to avoid re-pushing the RHS on every serial step.
    whh = whh_ref[...]
    h = h_scr[...]
    for t in range(t_chunk):  # static unroll (t_chunk is a compile-time int <= 128)
        h = jnp.tanh(gates_scr[:, t, :]
                     + jnp.dot(h, whh, preferred_element_type=jnp.float32))
        act_ref[:, t, :] = h.astype(act_ref.dtype)
    h_scr[...] = h

    # ---- (c) fc head batched over the chunk, fed from the act output block.
    acts = act_ref[...].astype(jnp.float32)            # (B_BLK, T_CHUNK, n_h)
    out_flat = (jnp.dot(acts.reshape(b_blk * t_chunk, n_h), wout_ref[...],
                        preferred_element_type=jnp.float32)
                + bout_ref[...])
    out_ref[...] = out_flat.reshape(b_blk, t_chunk, n_out).astype(out_ref.dtype)


# ---------------------------------------------------------------------------
# Tiling / VMEM selection (generation-aware).
# ---------------------------------------------------------------------------

def _vmem_capacity_bytes():
    try:
        return int(pltpu.get_tpu_info().vmem_capacity_bytes)
    except Exception:
        return 64 << 20  # conservative: v7x physical VMEM per TC


def _batch_candidates(B):
    """Prefer the whole batch (fewest serial recurrence passes); smaller blocks
    must be multiples of 8 to satisfy the (8,128) sublane rule."""
    cands = {B}
    if B % 8 == 0:
        cands.update(c for c in range(8, B, 8) if B % c == 0)
    return sorted(cands, reverse=True)


def _time_chunk_candidates(T, max_chunk):
    if T % 8 != 0:
        return [T]  # only the full axis satisfies the (8,128) rule
    cands = {c for c in range(8, min(T, max_chunk) + 1, 8) if T % c == 0}
    cands.add(min(T, max(cands) if cands else T))
    return sorted(cands, reverse=True)


def _select_tiling(B, T, n_in, n_h, n_out, isz, budget_bytes,
                   time_chunk=None, batch_block=None, max_time_chunk=64):
    def need(b, t):
        blocks = 2 * b * t * (n_in + n_h + n_out) * isz      # x/act/out double-buffered
        params = (n_in * n_h + n_h * n_h + n_h + n_h * n_out + n_out) * 4  # Buffered(1)
        h0 = b * n_h * isz                                    # Buffered(1)
        scratch = (b * n_h + b * t * n_h) * 4                 # h_scr + gates_scr
        return blocks + params + h0 + scratch

    b_cands = [batch_block] if batch_block is not None else _batch_candidates(B)
    t_cands = ([time_chunk] if time_chunk is not None
               else _time_chunk_candidates(T, max_time_chunk))
    # Prefer the biggest batch block (fewest serial passes); shrink t_chunk first.
    for b in b_cands:
        for t in t_cands:
            if need(b, t) <= budget_bytes:
                return b, t, need(b, t)
    b, t = b_cands[-1], t_cands[-1]
    return b, t, need(b, t)


def _bspec(shape, index_map, single_buffer):
    if single_buffer:
        # Grid-invariant operand: keep a single VMEM copy, no per-step re-DMA.
        return pl.BlockSpec(shape, index_map, pipeline_mode=pl.Buffered(1))
    return pl.BlockSpec(shape, index_map)


# ---------------------------------------------------------------------------
# Forward wrapper.
# ---------------------------------------------------------------------------

@functools.partial(jax.jit, static_argnames=("b_blk", "t_chunk", "vmem_limit",
                                              "single_buffer_weights"))
def _rnn_forward_impl(x, h0, W_in, W_rec, b_rec, W_out, b_out, *,
                      b_blk, t_chunk, vmem_limit, single_buffer_weights):
    B, T, n_in = x.shape
    n_h = W_rec.shape[0]
    n_out = W_out.shape[0]

    wih_t = W_in.T                                 # (n_in, n_h)
    whh_t = W_rec.T                                # (n_h, n_h)
    bias = (b_rec + b_rec).reshape(1, n_h)         # bias_ih + bias_hh (both == b_rec)
    wout_t = W_out.T                               # (n_h, n_out)
    bout = b_out.reshape(1, n_out)

    grid = (B // b_blk, T // t_chunk)
    sb = single_buffer_weights

    out, act = pl.pallas_call(
        rnn_chunk_kernel,
        out_shape=(jax.ShapeDtypeStruct((B, T, n_out), x.dtype),
                   jax.ShapeDtypeStruct((B, T, n_h), x.dtype)),
        grid_spec=pltpu.PrefetchScalarGridSpec(
            num_scalar_prefetch=0,
            grid=grid,
            in_specs=[
                _bspec((b_blk, t_chunk, n_in), lambda bb, cc: (bb, cc, 0), False),  # x
                _bspec((b_blk, n_h), lambda bb, cc: (bb, 0), sb),                   # h0
                _bspec((n_in, n_h), lambda bb, cc: (0, 0), sb),                     # W_ih^T
                _bspec((n_h, n_h), lambda bb, cc: (0, 0), sb),                      # W_hh^T
                _bspec((1, n_h), lambda bb, cc: (0, 0), sb),                        # bias
                _bspec((n_h, n_out), lambda bb, cc: (0, 0), sb),                    # W_out^T
                _bspec((1, n_out), lambda bb, cc: (0, 0), sb),                      # b_out
            ],
            out_specs=[
                pl.BlockSpec((b_blk, t_chunk, n_out), lambda bb, cc: (bb, cc, 0)),
                pl.BlockSpec((b_blk, t_chunk, n_h), lambda bb, cc: (bb, cc, 0)),
            ],
            scratch_shapes=[pltpu.VMEM((b_blk, n_h), jnp.float32),
                            pltpu.VMEM((b_blk, t_chunk, n_h), jnp.float32)],
        ),
        compiler_params=pltpu.CompilerParams(
            # batch blocks are independent (v7x megacore); time chunks are the
            # sequential recurrence axis (hidden state carried in h_scr).
            dimension_semantics=("parallel", "arbitrary"),
            vmem_limit_bytes=vmem_limit),
    )(x, h0, wih_t, whh_t, bias, wout_t, bout)

    return out, act


_SINGLE_BUFFER_WEIGHTS = True  # flipped off once if this build rejects pl.Buffered(1)


def rnn_forward(x, s0, W_in, W_rec, b_rec, W_out, b_out, *,
                time_chunk=None, batch_block=None):
    """x: (B, T, n_in) batch_first, s0: (1, B, n_h). Returns (out, activations)."""
    global _SINGLE_BUFFER_WEIGHTS

    B, T, n_in = x.shape
    n_h = W_rec.shape[0]
    n_out = W_out.shape[0]
    isz = jnp.dtype(x.dtype).itemsize

    cap = _vmem_capacity_bytes()
    max_chunk = 128 if cap >= (96 << 20) else 64
    budget = int(0.55 * cap)
    b_blk, t_chunk, need = _select_tiling(
        B, T, n_in, n_h, n_out, isz, budget,
        time_chunk=time_chunk, batch_block=batch_block, max_time_chunk=max_chunk)
    assert T % t_chunk == 0, (T, t_chunk)
    assert B % b_blk == 0, (B, b_blk)

    vmem_limit = int(min(max(need + (8 << 20), 32 << 20), int(0.85 * cap)))

    h0 = s0[0]  # (B, n_h)

    if _SINGLE_BUFFER_WEIGHTS:
        try:
            return _rnn_forward_impl(
                x, h0, W_in, W_rec, b_rec, W_out, b_out,
                b_blk=b_blk, t_chunk=t_chunk, vmem_limit=vmem_limit,
                single_buffer_weights=True)
        except Exception:
            # Older Pallas without pipeline_mode / Buffered(1): fall back to
            # default double-buffering (correctness identical).
            _SINGLE_BUFFER_WEIGHTS = False
    return _rnn_forward_impl(
        x, h0, W_in, W_rec, b_rec, W_out, b_out,
        b_blk=b_blk, t_chunk=t_chunk, vmem_limit=vmem_limit,
        single_buffer_weights=False)


# ---------------------------------------------------------------------------
# Parameter init (mirror of the torch initializeParameters) + pure-JAX reference.
# ---------------------------------------------------------------------------

def initialize_parameters(key, n_in, n_h, n_out):
    k1, k2, k3 = jax.random.split(key, 3)
    W_in = jax.random.normal(k1, (n_h, n_in), jnp.float32) * jnp.sqrt(1.0 / n_in)
    W_rec = jnp.linalg.qr(jax.random.normal(k2, (n_h, n_h), jnp.float32))[0]
    W_out = jax.random.normal(k3, (n_out, n_h), jnp.float32) * jnp.sqrt(1.0 / n_h)
    b_rec = jnp.zeros((n_h,), jnp.float32)
    b_out = jnp.zeros((n_out,), jnp.float32)
    return W_rec, W_in, b_rec, W_out, b_out


def reference_forward(x, s0, W_in, W_rec, b_rec, W_out, b_out):
    """Pure-JAX reference of nn.RNN(tanh, batch_first) + Linear."""
    def step(h, x_t):
        h_new = jnp.tanh(x_t @ W_in.T + b_rec + h @ W_rec.T + b_rec)
        return h_new, h_new
    x_tm = jnp.transpose(x, (1, 0, 2))
    _, hs = jax.lax.scan(step, s0[0], x_tm)           # (T, B, n_h)
    act = jnp.transpose(hs, (1, 0, 2))
    out = act @ W_out.T + b_out
    return out, act


def _check(B, T, n_in, n_h, n_out, seed, **kw):
    key = jax.random.PRNGKey(seed)
    kx, ks, kp = jax.random.split(key, 3)
    x = jax.random.normal(kx, (B, T, n_in), jnp.float32)
    s0 = jax.random.normal(ks, (1, B, n_h), jnp.float32)   # (num_layers, B, n_h)
    W_rec, W_in, b_rec, W_out, b_out = initialize_parameters(kp, n_in, n_h, n_out)

    out, act = rnn_forward(x, s0, W_in, W_rec, b_rec, W_out, b_out, **kw)
    out = jax.block_until_ready(out)
    act = jax.block_until_ready(act)

    out_ref, act_ref = reference_forward(x, s0, W_in, W_rec, b_rec, W_out, b_out)
    assert out.shape == (B, T, n_out) and act.shape == (B, T, n_h)
    assert jnp.allclose(out, out_ref, atol=1e-4, rtol=1e-4)
    assert jnp.allclose(act, act_ref, atol=1e-4, rtol=1e-4)


if __name__ == "__main__":
    # Small config implied by the module's forward.
    _check(B=2, T=8, n_in=4, n_h=32, n_out=4, seed=0)
    # Multi-chunk / multi-batch-block grid: exercises the h_scr carry across
    # time chunks and per-batch-block reinit (explicit overrides).
    _check(B=16, T=32, n_in=4, n_h=32, n_out=4, seed=1,
           time_chunk=8, batch_block=8)
    # Auto-tiled config with a larger time chunk and MXU-friendly n_h.
    _check(B=8, T=64, n_in=8, n_h=128, n_out=8, seed=2)
    print("KERNEL_OK")
</pallas_src>

<mosaic_0001>
module attributes {stable_mosaic.version = 11 : i64} {
  func.func @rnn_chunk_kernel(%arg0: i32, %arg1: i32, %arg2: memref<2x8x4xf32, #tpu.memory_space<vmem>>, %arg3: memref<2x32xf32, #tpu.memory_space<vmem>>, %arg4: memref<4x32xf32, #tpu.memory_space<vmem>>, %arg5: memref<32x32xf32, #tpu.memory_space<vmem>>, %arg6: memref<1x32xf32, #tpu.memory_space<vmem>>, %arg7: memref<32x4xf32, #tpu.memory_space<vmem>>, %arg8: memref<1x4xf32, #tpu.memory_space<vmem>>, %arg9: memref<2x8x4xf32, #tpu.memory_space<vmem>>, %arg10: memref<2x8x32xf32, #tpu.memory_space<vmem>>, %arg11: memref<2x32xf32, #tpu.memory_space<vmem>>, %arg12: memref<2x8x32xf32, #tpu.memory_space<vmem>>) attributes {dimension_semantics = [#tpu.dimension_semantics<parallel>, #tpu.dimension_semantics<arbitrary>], iteration_bounds = array<i64: 1, 1>, scalar_prefetch = 0 : i64, scratch_operands = 2 : i64, tpu.core_type = #tpu.core_type<tc>, window_params = [{transform_indices = @transform_0, window_bounds = array<i64: 2, 8, 4>}, {pipeline_mode = #tpu.pipeline_mode<synchronous>, transform_indices = @transform_1, window_bounds = array<i64: 2, 32>}, {pipeline_mode = #tpu.pipeline_mode<synchronous>, transform_indices = @transform_2, window_bounds = array<i64: 4, 32>}, {pipeline_mode = #tpu.pipeline_mode<synchronous>, transform_indices = @transform_3, window_bounds = array<i64: 32, 32>}, {pipeline_mode = #tpu.pipeline_mode<synchronous>, transform_indices = @transform_4, window_bounds = array<i64: 1, 32>}, {pipeline_mode = #tpu.pipeline_mode<synchronous>, transform_indices = @transform_5, window_bounds = array<i64: 32, 4>}, {pipeline_mode = #tpu.pipeline_mode<synchronous>, transform_indices = @transform_6, window_bounds = array<i64: 1, 4>}, {transform_indices = @transform_7, window_bounds = array<i64: 2, 8, 4>}, {transform_indices = @transform_8, window_bounds = array<i64: 2, 8, 32>}]} {
    %c0_i32 = arith.constant 0 : i32
    %0 = arith.cmpi eq, %arg1, %c0_i32 : i32
    %1 = arith.extui %0 : i1 to i32
    %c0_i32_0 = arith.constant 0 : i32
    %2 = arith.cmpi ne, %1, %c0_i32_0 : i32
    scf.if %2 {
      %c0_76 = arith.constant 0 : index
      %c0_77 = arith.constant 0 : index
      %88 = vector.load %arg3[%c0_76, %c0_77] : memref<2x32xf32, #tpu.memory_space<vmem>>, vector<2x32xf32>
      %c0_78 = arith.constant 0 : index
      %c0_79 = arith.constant 0 : index
      %89 = vector.load %arg11[%c0_78, %c0_79] : memref<2x32xf32, #tpu.memory_space<vmem>>, vector<2x32xf32>
      tpu.vector_store %arg11[%c0_78, %c0_79], %88 {strides = array<i32>} : memref<2x32xf32, #tpu.memory_space<vmem>>, vector<2x32xf32>,
    } else {
    }
    %c0 = arith.constant 0 : index
    %c0_1 = arith.constant 0 : index
    %c0_2 = arith.constant 0 : index
    %3 = vector.load %arg2[%c0, %c0_1, %c0_2] : memref<2x8x4xf32, #tpu.memory_space<vmem>>, vector<2x8x4xf32>
    %4 = vector.shape_cast %3 : vector<2x8x4xf32> to vector<16x4xf32>
    %c0_3 = arith.constant 0 : index
    %c0_4 = arith.constant 0 : index
    %5 = vector.load %arg4[%c0_3, %c0_4] : memref<4x32xf32, #tpu.memory_space<vmem>>, vector<4x32xf32>
    %cst = arith.constant dense<0.000000e+00> : vector<16x32xf32>
    %6 = tpu.matmul %4, %5, %cst {dimension_numbers = #tpu.dot_dimension_numbers<[1], [0], [0], [1], [0, 0, 1, 1], [], []>} : vector<16x4xf32>, vector<4x32xf32>, vector<16x32xf32> -> vector<16x32xf32>
    %c0_5 = arith.constant 0 : index
    %c0_6 = arith.constant 0 : index
    %7 = vector.load %arg6[%c0_5, %c0_6] : memref<1x32xf32, #tpu.memory_space<vmem>>, vector<1x32xf32>
    %8 = vector.broadcast %7 : vector<1x32xf32> to vector<16x32xf32>
    %9 = arith.addf %6, %8 : vector<16x32xf32>
    %10 = vector.shape_cast %9 : vector<16x32xf32> to vector<2x8x32xf32>
    %c0_7 = arith.constant 0 : index
    %c0_8 = arith.constant 0 : index
    %c0_9 = arith.constant 0 : index
    %11 = vector.load %arg12[%c0_7, %c0_8, %c0_9] : memref<2x8x32xf32, #tpu.memory_space<vmem>>, vector<2x8x32xf32>
    tpu.vector_store %arg12[%c0_7, %c0_8, %c0_9], %10 {strides = array<i32>} : memref<2x8x32xf32, #tpu.memory_space<vmem>>, vector<2x8x32xf32>,
    %c0_10 = arith.constant 0 : index
    %c0_11 = arith.constant 0 : index
    %12 = vector.load %arg5[%c0_10, %c0_11] : memref<32x32xf32, #tpu.memory_space<vmem>>, vector<32x32xf32>
    %c0_12 = arith.constant 0 : index
    %c0_13 = arith.constant 0 : index
    %13 = vector.load %arg11[%c0_12, %c0_13] : memref<2x32xf32, #tpu.memory_space<vmem>>, vector<2x32xf32>
    %c0_14 = arith.constant 0 : index
    %c0_15 = arith.constant 0 : index
    %c0_16 = arith.constant 0 : index
    %14 = vector.load %arg12[%c0_14, %c0_15, %c0_16] : memref<2x8x32xf32, #tpu.memory_space<vmem>>, vector<2x1x32xf32>
    %15 = vector.shape_cast %14 : vector<2x1x32xf32> to vector<2x32xf32>
    %cst_17 = arith.constant dense<0.000000e+00> : vector<2x32xf32>
    %16 = tpu.matmul %13, %12, %cst_17 {dimension_numbers = #tpu.dot_dimension_numbers<[1], [0], [0], [1], [0, 0, 1, 1], [], []>} : vector<2x32xf32>, vector<32x32xf32>, vector<2x32xf32> -> vector<2x32xf32>
    %17 = arith.addf %15, %16 : vector<2x32xf32>
    %18 = math.tanh %17 : vector<2x32xf32>
    %c0_18 = arith.constant 0 : index
    %c0_19 = arith.constant 0 : index
    %c0_20 = arith.constant 0 : index
    %19 = vector.load %arg10[%c0_18, %c0_19, %c0_20] : memref<2x8x32xf32, #tpu.memory_space<vmem>>, vector<2x1x32xf32>
    %20 = vector.shape_cast %19 : vector<2x1x32xf32> to vector<2x32xf32>
    %21 = vector.shape_cast %18 : vector<2x32xf32> to vector<2x1x32xf32>
    tpu.vector_store %arg10[%c0_18, %c0_19, %c0_20], %21 {strides = array<i32>} : memref<2x8x32xf32, #tpu.memory_space<vmem>>, vector<2x1x32xf32>,
    %c0_21 = arith.constant 0 : index
    %c1 = arith.constant 1 : index
    %c0_22 = arith.constant 0 : index
    %22 = vector.load %arg12[%c0_21, %c1, %c0_22] : memref<2x8x32xf32, #tpu.memory_space<vmem>>, vector<2x1x32xf32>
    %23 = vector.shape_cast %22 : vector<2x1x32xf32> to vector<2x32xf32>
    %cst_23 = arith.constant dense<0.000000e+00> : vector<2x32xf32>
    %24 = tpu.matmul %18, %12, %cst_23 {dimension_numbers = #tpu.dot_dimension_numbers<[1], [0], [0], [1], [0, 0, 1, 1], [], []>} : vector<2x32xf32>, vector<32x32xf32>, vector<2x32xf32> -> vector<2x32xf32>
    %25 = arith.addf %23, %24 : vector<2x32xf32>
    %26 = math.tanh %25 : vector<2x32xf32>
    %c0_24 = arith.constant 0 : index
    %c1_25 = arith.constant 1 : index
    %c0_26 = arith.constant 0 : index
    %27 = vector.load %arg10[%c0_24, %c1_25, %c0_26] : memref<2x8x32xf32, #tpu.memory_space<vmem>>, vector<2x1x32xf32>
    %28 = vector.shape_cast %27 : vector<2x1x32xf32> to vector<2x32xf32>
    %29 = vector.shape_cast %26 : vector<2x32xf32> to vector<2x1x32xf32>
    tpu.vector_store %arg10[%c0_24, %c1_25, %c0_26], %29 {strides = array<i32>} : memref<2x8x32xf32, #tpu.memory_space<vmem>>, vector<2x1x32xf32>,
    %c0_27 = arith.constant 0 : index
    %c2 = arith.constant 2 : index
    %c0_28 = arith.constant 0 : index
    %30 = vector.load %arg12[%c0_27, %c2, %c0_28] : memref<2x8x32xf32, #tpu.memory_space<vmem>>, vector<2x1x32xf32>
    %31 = vector.shape_cast %30 : vector<2x1x32xf32> to vector<2x32xf32>
    %cst_29 = arith.constant dense<0.000000e+00> : vector<2x32xf32>
    %32 = tpu.matmul %26, %12, %cst_29 {dimension_numbers = #tpu.dot_dimension_numbers<[1], [0], [0], [1], [0, 0, 1, 1], [], []>} : vector<2x32xf32>, vector<32x32xf32>, vector<2x32xf32> -> vector<2x32xf32>
    %33 = arith.addf %31, %32 : vector<2x32xf32>
    %34 = math.tanh %33 : vector<2x32xf32>
    %c0_30 = arith.constant 0 : index
    %c2_31 = arith.constant 2 : index
    %c0_32 = arith.constant 0 : index
    %35 = vector.load %arg10[%c0_30, %c2_31, %c0_32] : memref<2x8x32xf32, #tpu.memory_space<vmem>>, vector<2x1x32xf32>
    %36 = vector.shape_cast %35 : vector<2x1x32xf32> to vector<2x32xf32>
    %37 = vector.shape_cast %34 : vector<2x32xf32> to vector<2x1x32xf32>
    tpu.vector_store %arg10[%c0_30, %c2_31, %c0_32], %37 {strides = array<i32>} : memref<2x8x32xf32, #tpu.memory_space<vmem>>, vector<2x1x32xf32>,
    %c0_33 = arith.constant 0 : index
    %c3 = arith.constant 3 : index
    %c0_34 = arith.constant 0 : index
    %38 = vector.load %arg12[%c0_33, %c3, %c0_34] : memref<2x8x32xf32, #tpu.memory_space<vmem>>, vector<2x1x32xf32>
    %39 = vector.shape_cast %38 : vector<2x1x32xf32> to vector<2x32xf32>
    %cst_35 = arith.constant dense<0.000000e+00> : vector<2x32xf32>
    %40 = tpu.matmul %34, %12, %cst_35 {dimension_numbers = #tpu.dot_dimension_numbers<[1], [0], [0], [1], [0, 0, 1, 1], [], []>} : vector<2x32xf32>, vector<32x32xf32>, vector<2x32xf32> -> vector<2x32xf32>
    %41 = arith.addf %39, %40 : vector<2x32xf32>
    %42 = math.tanh %41 : vector<2x32xf32>
    %c0_36 = arith.constant 0 : index
    %c3_37 = arith.constant 3 : index
    %c0_38 = arith.constant 0 : index
    %43 = vector.load %arg10[%c0_36, %c3_37, %c0_38] : memref<2x8x32xf32, #tpu.memory_space<vmem>>, vector<2x1x32xf32>
    %44 = vector.shape_cast %43 : vector<2x1x32xf32> to vector<2x32xf32>
    %45 = vector.shape_cast %42 : vector<2x32xf32> to vector<2x1x32xf32>
    tpu.vector_store %arg10[%c0_36, %c3_37, %c0_38], %45 {strides = array<i32>} : memref<2x8x32xf32, #tpu.memory_space<vmem>>, vector<2x1x32xf32>,
    %c0_39 = arith.constant 0 : index
    %c4 = arith.constant 4 : index
    %c0_40 = arith.constant 0 : index
    %46 = vector.load %arg12[%c0_39, %c4, %c0_40] : memref<2x8x32xf32, #tpu.memory_space<vmem>>, vector<2x1x32xf32>
    %47 = vector.shape_cast %46 : vector<2x1x32xf32> to vector<2x32xf32>
    %cst_41 = arith.constant dense<0.000000e+00> : vector<2x32xf32>
    %48 = tpu.matmul %42, %12, %cst_41 {dimension_numbers = #tpu.dot_dimension_numbers<[1], [0], [0], [1], [0, 0, 1, 1], [], []>} : vector<2x32xf32>, vector<32x32xf32>, vector<2x32xf32> -> vector<2x32xf32>
    %49 = arith.addf %47, %48 : vector<2x32xf32>
    %50 = math.tanh %49 : vector<2x32xf32>
    %c0_42 = arith.constant 0 : index
    %c4_43 = arith.constant 4 : index
    %c0_44 = arith.constant 0 : index
    %51 = vector.load %arg10[%c0_42, %c4_43, %c0_44] : memref<2x8x32xf32, #tpu.memory_space<vmem>>, vector<2x1x32xf32>
    %52 = vector.shape_cast %51 : vector<2x1x32xf32> to vector<2x32xf32>
    %53 = vector.shape_cast %50 : vector<2x32xf32> to vector<2x1x32xf32>
    tpu.vector_store %arg10[%c0_42, %c4_43, %c0_44], %53 {strides = array<i32>} : memref<2x8x32xf32, #tpu.memory_space<vmem>>, vector<2x1x32xf32>,
    %c0_45 = arith.constant 0 : index
    %c5 = arith.constant 5 : index
    %c0_46 = arith.constant 0 : index
    %54 = vector.load %arg12[%c0_45, %c5, %c0_46] : memref<2x8x32xf32, #tpu.memory_space<vmem>>, vector<2x1x32xf32>
    %55 = vector.shape_cast %54 : vector<2x1x32xf32> to vector<2x32xf32>
    %cst_47 = arith.constant dense<0.000000e+00> : vector<2x32xf32>
    %56 = tpu.matmul %50, %12, %cst_47 {dimension_numbers = #tpu.dot_dimension_numbers<[1], [0], [0], [1], [0, 0, 1, 1], [], []>} : vector<2x32xf32>, vector<32x32xf32>, vector<2x32xf32> -> vector<2x32xf32>
    %57 = arith.addf %55, %56 : vector<2x32xf32>
    %58 = math.tanh %57 : vector<2x32xf32>
    %c0_48 = arith.constant 0 : index
    %c5_49 = arith.constant 5 : index
    %c0_50 = arith.constant 0 : index
    %59 = vector.load %arg10[%c0_48, %c5_49, %c0_50] : memref<2x8x32xf32, #tpu.memory_space<vmem>>, vector<2x1x32xf32>
    %60 = vector.shape_cast %59 : vector<2x1x32xf32> to vector<2x32xf32>
    %61 = vector.shape_cast %58 : vector<2x32xf32> to vector<2x1x32xf32>
    tpu.vector_store %arg10[%c0_48, %c5_49, %c0_50], %61 {strides = array<i32>} : memref<2x8x32xf32, #tpu.memory_space<vmem>>, vector<2x1x32xf32>,
    %c0_51 = arith.constant 0 : index
    %c6 = arith.constant 6 : index
    %c0_52 = arith.constant 0 : index
    %62 = vector.load %arg12[%c0_51, %c6, %c0_52] : memref<2x8x32xf32, #tpu.memory_space<vmem>>, vector<2x1x32xf32>
    %63 = vector.shape_cast %62 : vector<2x1x32xf32> to vector<2x32xf32>
    %cst_53 = arith.constant dense<0.000000e+00> : vector<2x32xf32>
    %64 = tpu.matmul %58, %12, %cst_53 {dimension_numbers = #tpu.dot_dimension_numbers<[1], [0], [0], [1], [0, 0, 1, 1], [], []>} : vector<2x32xf32>, vector<32x32xf32>, vector<2x32xf32> -> vector<2x32xf32>
    %65 = arith.addf %63, %64 : vector<2x32xf32>
    %66 = math.tanh %65 : vector<2x32xf32>
    %c0_54 = arith.constant 0 : index
    %c6_55 = arith.constant 6 : index
    %c0_56 = arith.constant 0 : index
    %67 = vector.load %arg10[%c0_54, %c6_55, %c0_56] : memref<2x8x32xf32, #tpu.memory_space<vmem>>, vector<2x1x32xf32>
    %68 = vector.shape_cast %67 : vector<2x1x32xf32> to vector<2x32xf32>
    %69 = vector.shape_cast %66 : vector<2x32xf32> to vector<2x1x32xf32>
    tpu.vector_store %arg10[%c0_54, %c6_55, %c0_56], %69 {strides = array<i32>} : memref<2x8x32xf32, #tpu.memory_space<vmem>>, vector<2x1x32xf32>,
    %c0_57 = arith.constant 0 : index
    %c7 = arith.constant 7 : index
    %c0_58 = arith.constant 0 : index
    %70 = vector.load %arg12[%c0_57, %c7, %c0_58] : memref<2x8x32xf32, #tpu.memory_space<vmem>>, vector<2x1x32xf32>
    %71 = vector.shape_cast %70 : vector<2x1x32xf32> to vector<2x32xf32>
    %cst_59 = arith.constant dense<0.000000e+00> : vector<2x32xf32>
    %72 = tpu.matmul %66, %12, %cst_59 {dimension_numbers = #tpu.dot_dimension_numbers<[1], [0], [0], [1], [0, 0, 1, 1], [], []>} : vector<2x32xf32>, vector<32x32xf32>, vector<2x32xf32> -> vector<2x32xf32>
    %73 = arith.addf %71, %72 : vector<2x32xf32>
    %74 = math.tanh %73 : vector<2x32xf32>
    %c0_60 = arith.constant 0 : index
    %c7_61 = arith.constant 7 : index
    %c0_62 = arith.constant 0 : index
    %75 = vector.load %arg10[%c0_60, %c7_61, %c0_62] : memref<2x8x32xf32, #tpu.memory_space<vmem>>, vector<2x1x32xf32>
    %76 = vector.shape_cast %75 : vector<2x1x32xf32> to vector<2x32xf32>
    %77 = vector.shape_cast %74 : vector<2x32xf32> to vector<2x1x32xf32>
    tpu.vector_store %arg10[%c0_60, %c7_61, %c0_62], %77 {strides = array<i32>} : memref<2x8x32xf32, #tpu.memory_space<vmem>>, vector<2x1x32xf32>,
    %c0_63 = arith.constant 0 : index
    %c0_64 = arith.constant 0 : index
    %78 = vector.load %arg11[%c0_63, %c0_64] : memref<2x32xf32, #tpu.memory_space<vmem>>, vector<2x32xf32>
    tpu.vector_store %arg11[%c0_63, %c0_64], %74 {strides = array<i32>} : memref<2x32xf32, #tpu.memory_space<vmem>>, vector<2x32xf32>,
    %c0_65 = arith.constant 0 : index
    %c0_66 = arith.constant 0 : index
    %c0_67 = arith.constant 0 : index
    %79 = vector.load %arg10[%c0_65, %c0_66, %c0_67] : memref<2x8x32xf32, #tpu.memory_space<vmem>>, vector<2x8x32xf32>
    %80 = vector.shape_cast %79 : vector<2x8x32xf32> to vector<16x32xf32>
    %c0_68 = arith.constant 0 : index
    %c0_69 = arith.constant 0 : index
    %81 = vector.load %arg7[%c0_68, %c0_69] : memref<32x4xf32, #tpu.memory_space<vmem>>, vector<32x4xf32>
    %cst_70 = arith.constant dense<0.000000e+00> : vector<16x4xf32>
    %82 = tpu.matmul %80, %81, %cst_70 {dimension_numbers = #tpu.dot_dimension_numbers<[1], [0], [0], [1], [0, 0, 1, 1], [], []>} : vector<16x32xf32>, vector<32x4xf32>, vector<16x4xf32> -> vector<16x4xf32>
    %c0_71 = arith.constant 0 : index
    %c0_72 = arith.constant 0 : index
    %83 = vector.load %arg8[%c0_71, %c0_72] : memref<1x4xf32, #tpu.memory_space<vmem>>, vector<1x4xf32>
    %84 = vector.broadcast %83 : vector<1x4xf32> to vector<16x4xf32>
    %85 = arith.addf %82, %84 : vector<16x4xf32>
    %86 = vector.shape_cast %85 : vector<16x4xf32> to vector<2x8x4xf32>
    %c0_73 = arith.constant 0 : index
    %c0_74 = arith.constant 0 : index
    %c0_75 = arith.constant 0 : index
    %87 = vector.load %arg9[%c0_73, %c0_74, %c0_75] : memref<2x8x4xf32, #tpu.memory_space<vmem>>, vector<2x8x4xf32>
    tpu.vector_store %arg9[%c0_73, %c0_74, %c0_75], %86 {strides = array<i32>} : memref<2x8x4xf32, #tpu.memory_space<vmem>>, vector<2x8x4xf32>,
    return
  }
  func.func @transform_0(%arg0: i32, %arg1: i32) -> (i32, i32, i32) {
    %c0_i32 = arith.constant 0 : i32
    %c0_i32_0 = arith.constant 0 : i32
    return %arg0, %arg1, %c0_i32 : i32, i32, i32
  }
  func.func @transform_1(%arg0: i32, %arg1: i32) -> (i32, i32) {
    %c0_i32 = arith.constant 0 : i32
    %c0_i32_0 = arith.constant 0 : i32
    return %arg0, %c0_i32 : i32, i32
  }
  func.func @transform_2(%arg0: i32, %arg1: i32) -> (i32, i32) {
    %c0_i32 = arith.constant 0 : i32
    %c0_i32_0 = arith.constant 0 : i32
    %c0_i32_1 = arith.constant 0 : i32
    return %c0_i32, %c0_i32_0 : i32, i32
  }
  func.func @transform_3(%arg0: i32, %arg1: i32) -> (i32, i32) {
    %c0_i32 = arith.constant 0 : i32
    %c0_i32_0 = arith.constant 0 : i32
    %c0_i32_1 = arith.constant 0 : i32
    return %c0_i32, %c0_i32_0 : i32, i32
  }
  func.func @transform_4(%arg0: i32, %arg1: i32) -> (i32, i32) {
    %c0_i32 = arith.constant 0 : i32
    %c0_i32_0 = arith.constant 0 : i32
    %c0_i32_1 = arith.constant 0 : i32
    return %c0_i32, %c0_i32_0 : i32, i32
  }
  func.func @transform_5(%arg0: i32, %arg1: i32) -> (i32, i32) {
    %c0_i32 = arith.constant 0 : i32
    %c0_i32_0 = arith.constant 0 : i32
    %c0_i32_1 = arith.constant 0 : i32
    return %c0_i32, %c0_i32_0 : i32, i32
  }
  func.func @transform_6(%arg0: i32, %arg1: i32) -> (i32, i32) {
    %c0_i32 = arith.constant 0 : i32
    %c0_i32_0 = arith.constant 0 : i32
    %c0_i32_1 = arith.constant 0 : i32
    return %c0_i32, %c0_i32_0 : i32, i32
  }
  func.func @transform_7(%arg0: i32, %arg1: i32) -> (i32, i32, i32) {
    %c0_i32 = arith.constant 0 : i32
    %c0_i32_0 = arith.constant 0 : i32
    return %arg0, %arg1, %c0_i32 : i32, i32, i32
  }
  func.func @transform_8(%arg0: i32, %arg1: i32) -> (i32, i32, i32) {
    %c0_i32 = arith.constant 0 : i32
    %c0_i32_0 = arith.constant 0 : i32
    return %arg0, %arg1, %c0_i32 : i32, i32, i32
  }
}

module attributes {stable_mosaic.version = 11 : i64} {
  func.func @rnn_chunk_kernel(%arg0: i32, %arg1: i32, %arg2: memref<2x8x4xf32, #tpu.memory_space<vmem>>, %arg3: memref<2x32xf32, #tpu.memory_space<vmem>>, %arg4: memref<4x32xf32, #tpu.memory_space<vmem>>, %arg5: memref<32x32xf32, #tpu.memory_space<vmem>>, %arg6: memref<1x32xf32, #tpu.memory_space<vmem>>, %arg7: memref<32x4xf32, #tpu.memory_space<vmem>>, %arg8: memref<1x4xf32, #tpu.memory_space<vmem>>, %arg9: memref<2x8x4xf32, #tpu.memory_space<vmem>>, %arg10: memref<2x8x32xf32, #tpu.memory_space<vmem>>, %arg11: memref<2x32xf32, #tpu.memory_space<vmem>>, %arg12: memref<2x8x32xf32, #tpu.memory_space<vmem>>) attributes {dimension_semantics = [#tpu.dimension_semantics<parallel>, #tpu.dimension_semantics<arbitrary>], iteration_bounds = array<i64: 1, 1>, scalar_prefetch = 0 : i64, scratch_operands = 2 : i64, tpu.core_type = #tpu.core_type<tc>, window_params = [{transform_indices = @transform_0, window_bounds = array<i64: 2, 8, 4>}, {transform_indices = @transform_1, window_bounds = array<i64: 2, 32>}, {pipeline_mode = #tpu.pipeline_mode<synchronous>, transform_indices = @transform_2, window_bounds = array<i64: 4, 32>}, {pipeline_mode = #tpu.pipeline_mode<synchronous>, transform_indices = @transform_3, window_bounds = array<i64: 32, 32>}, {pipeline_mode = #tpu.pipeline_mode<synchronous>, transform_indices = @transform_4, window_bounds = array<i64: 1, 32>}, {pipeline_mode = #tpu.pipeline_mode<synchronous>, transform_indices = @transform_5, window_bounds = array<i64: 32, 4>}, {pipeline_mode = #tpu.pipeline_mode<synchronous>, transform_indices = @transform_6, window_bounds = array<i64: 1, 4>}, {transform_indices = @transform_7, window_bounds = array<i64: 2, 8, 4>}, {transform_indices = @transform_8, window_bounds = array<i64: 2, 8, 32>}]} {
    %c0_i32 = arith.constant 0 : i32
    %0 = arith.cmpi eq, %arg1, %c0_i32 : i32
    %1 = arith.extui %0 : i1 to i32
    %c0_i32_0 = arith.constant 0 : i32
    %2 = arith.cmpi ne, %1, %c0_i32_0 : i32
    scf.if %2 {
      %c0_76 = arith.constant 0 : index
      %c0_77 = arith.constant 0 : index
      %88 = vector.load %arg3[%c0_76, %c0_77] : memref<2x32xf32, #tpu.memory_space<vmem>>, vector<2x32xf32>
      %c0_78 = arith.constant 0 : index
      %c0_79 = arith.constant 0 : index
      %89 = vector.load %arg11[%c0_78, %c0_79] : memref<2x32xf32, #tpu.memory_space<vmem>>, vector<2x32xf32>
      tpu.vector_store %arg11[%c0_78, %c0_79], %88 {strides = array<i32>} : memref<2x32xf32, #tpu.memory_space<vmem>>, vector<2x32xf32>,
    } else {
    }
    %c0 = arith.constant 0 : index
    %c0_1 = arith.constant 0 : index
    %c0_2 = arith.constant 0 : index
    %3 = vector.load %arg2[%c0, %c0_1, %c0_2] : memref<2x8x4xf32, #tpu.memory_space<vmem>>, vector<2x8x4xf32>
    %4 = vector.shape_cast %3 : vector<2x8x4xf32> to vector<16x4xf32>
    %c0_3 = arith.constant 0 : index
    %c0_4 = arith.constant 0 : index
    %5 = vector.load %arg4[%c0_3, %c0_4] : memref<4x32xf32, #tpu.memory_space<vmem>>, vector<4x32xf32>
    %cst = arith.constant dense<0.000000e+00> : vector<16x32xf32>
    %6 = tpu.matmul %4, %5, %cst {dimension_numbers = #tpu.dot_dimension_numbers<[1], [0], [0], [1], [0, 0, 1, 1], [], []>} : vector<16x4xf32>, vector<4x32xf32>, vector<16x32xf32> -> vector<16x32xf32>
    %c0_5 = arith.constant 0 : index
    %c0_6 = arith.constant 0 : index
    %7 = vector.load %arg6[%c0_5, %c0_6] : memref<1x32xf32, #tpu.memory_space<vmem>>, vector<1x32xf32>
    %8 = vector.broadcast %7 : vector<1x32xf32> to vector<16x32xf32>
    %9 = arith.addf %6, %8 : vector<16x32xf32>
    %10 = vector.shape_cast %9 : vector<16x32xf32> to vector<2x8x32xf32>
    %c0_7 = arith.constant 0 : index
    %c0_8 = arith.constant 0 : index
    %c0_9 = arith.constant 0 : index
    %11 = vector.load %arg12[%c0_7, %c0_8, %c0_9] : memref<2x8x32xf32, #tpu.memory_space<vmem>>, vector<2x8x32xf32>
    tpu.vector_store %arg12[%c0_7, %c0_8, %c0_9], %10 {strides = array<i32>} : memref<2x8x32xf32, #tpu.memory_space<vmem>>, vector<2x8x32xf32>,
    %c0_10 = arith.constant 0 : index
    %c0_11 = arith.constant 0 : index
    %12 = vector.load %arg5[%c0_10, %c0_11] : memref<32x32xf32, #tpu.memory_space<vmem>>, vector<32x32xf32>
    %c0_12 = arith.constant 0 : index
    %c0_13 = arith.constant 0 : index
    %13 = vector.load %arg11[%c0_12, %c0_13] : memref<2x32xf32, #tpu.memory_space<vmem>>, vector<2x32xf32>
    %c0_14 = arith.constant 0 : index
    %c0_15 = arith.constant 0 : index
    %c0_16 = arith.constant 0 : index
    %14 = vector.load %arg12[%c0_14, %c0_15, %c0_16] : memref<2x8x32xf32, #tpu.memory_space<vmem>>, vector<2x1x32xf32>
    %15 = vector.shape_cast %14 : vector<2x1x32xf32> to vector<2x32xf32>
    %cst_17 = arith.constant dense<0.000000e+00> : vector<2x32xf32>
    %16 = tpu.matmul %13, %12, %cst_17 {dimension_numbers = #tpu.dot_dimension_numbers<[1], [0], [0], [1], [0, 0, 1, 1], [], []>} : vector<2x32xf32>, vector<32x32xf32>, vector<2x32xf32> -> vector<2x32xf32>
    %17 = arith.addf %15, %16 : vector<2x32xf32>
    %18 = math.tanh %17 : vector<2x32xf32>
    %c0_18 = arith.constant 0 : index
    %c0_19 = arith.constant 0 : index
    %c0_20 = arith.constant 0 : index
    %19 = vector.load %arg10[%c0_18, %c0_19, %c0_20] : memref<2x8x32xf32, #tpu.memory_space<vmem>>, vector<2x1x32xf32>
    %20 = vector.shape_cast %19 : vector<2x1x32xf32> to vector<2x32xf32>
    %21 = vector.shape_cast %18 : vector<2x32xf32> to vector<2x1x32xf32>
    tpu.vector_store %arg10[%c0_18, %c0_19, %c0_20], %21 {strides = array<i32>} : memref<2x8x32xf32, #tpu.memory_space<vmem>>, vector<2x1x32xf32>,
    %c0_21 = arith.constant 0 : index
    %c1 = arith.constant 1 : index
    %c0_22 = arith.constant 0 : index
    %22 = vector.load %arg12[%c0_21, %c1, %c0_22] : memref<2x8x32xf32, #tpu.memory_space<vmem>>, vector<2x1x32xf32>
    %23 = vector.shape_cast %22 : vector<2x1x32xf32> to vector<2x32xf32>
    %cst_23 = arith.constant dense<0.000000e+00> : vector<2x32xf32>
    %24 = tpu.matmul %18, %12, %cst_23 {dimension_numbers = #tpu.dot_dimension_numbers<[1], [0], [0], [1], [0, 0, 1, 1], [], []>} : vector<2x32xf32>, vector<32x32xf32>, vector<2x32xf32> -> vector<2x32xf32>
    %25 = arith.addf %23, %24 : vector<2x32xf32>
    %26 = math.tanh %25 : vector<2x32xf32>
    %c0_24 = arith.constant 0 : index
    %c1_25 = arith.constant 1 : index
    %c0_26 = arith.constant 0 : index
    %27 = vector.load %arg10[%c0_24, %c1_25, %c0_26] : memref<2x8x32xf32, #tpu.memory_space<vmem>>, vector<2x1x32xf32>
    %28 = vector.shape_cast %27 : vector<2x1x32xf32> to vector<2x32xf32>
    %29 = vector.shape_cast %26 : vector<2x32xf32> to vector<2x1x32xf32>
    tpu.vector_store %arg10[%c0_24, %c1_25, %c0_26], %29 {strides = array<i32>} : memref<2x8x32xf32, #tpu.memory_space<vmem>>, vector<2x1x32xf32>,
    %c0_27 = arith.constant 0 : index
    %c2 = arith.constant 2 : index
    %c0_28 = arith.constant 0 : index
    %30 = vector.load %arg12[%c0_27, %c2, %c0_28] : memref<2x8x32xf32, #tpu.memory_space<vmem>>, vector<2x1x32xf32>
    %31 = vector.shape_cast %30 : vector<2x1x32xf32> to vector<2x32xf32>
    %cst_29 = arith.constant dense<0.000000e+00> : vector<2x32xf32>
    %32 = tpu.matmul %26, %12, %cst_29 {dimension_numbers = #tpu.dot_dimension_numbers<[1], [0], [0], [1], [0, 0, 1, 1], [], []>} : vector<2x32xf32>, vector<32x32xf32>, vector<2x32xf32> -> vector<2x32xf32>
    %33 = arith.addf %31, %32 : vector<2x32xf32>
    %34 = math.tanh %33 : vector<2x32xf32>
    %c0_30 = arith.constant 0 : index
    %c2_31 = arith.constant 2 : index
    %c0_32 = arith.constant 0 : index
    %35 = vector.load %arg10[%c0_30, %c2_31, %c0_32] : memref<2x8x32xf32, #tpu.memory_space<vmem>>, vector<2x1x32xf32>
    %36 = vector.shape_cast %35 : vector<2x1x32xf32> to vector<2x32xf32>
    %37 = vector.shape_cast %34 : vector<2x32xf32> to vector<2x1x32xf32>
    tpu.vector_store %arg10[%c0_30, %c2_31, %c0_32], %37 {strides = array<i32>} : memref<2x8x32xf32, #tpu.memory_space<vmem>>, vector<2x1x32xf32>,
    %c0_33 = arith.constant 0 : index
    %c3 = arith.constant 3 : index
    %c0_34 = arith.constant 0 : index
    %38 = vector.load %arg12[%c0_33, %c3, %c0_34] : memref<2x8x32xf32, #tpu.memory_space<vmem>>, vector<2x1x32xf32>
    %39 = vector.shape_cast %38 : vector<2x1x32xf32> to vector<2x32xf32>
    %cst_35 = arith.constant dense<0.000000e+00> : vector<2x32xf32>
    %40 = tpu.matmul %34, %12, %cst_35 {dimension_numbers = #tpu.dot_dimension_numbers<[1], [0], [0], [1], [0, 0, 1, 1], [], []>} : vector<2x32xf32>, vector<32x32xf32>, vector<2x32xf32> -> vector<2x32xf32>
    %41 = arith.addf %39, %40 : vector<2x32xf32>
    %42 = math.tanh %41 : vector<2x32xf32>
    %c0_36 = arith.constant 0 : index
    %c3_37 = arith.constant 3 : index
    %c0_38 = arith.constant 0 : index
    %43 = vector.load %arg10[%c0_36, %c3_37, %c0_38] : memref<2x8x32xf32, #tpu.memory_space<vmem>>, vector<2x1x32xf32>
    %44 = vector.shape_cast %43 : vector<2x1x32xf32> to vector<2x32xf32>
    %45 = vector.shape_cast %42 : vector<2x32xf32> to vector<2x1x32xf32>
    tpu.vector_store %arg10[%c0_36, %c3_37, %c0_38], %45 {strides = array<i32>} : memref<2x8x32xf32, #tpu.memory_space<vmem>>, vector<2x1x32xf32>,
    %c0_39 = arith.constant 0 : index
    %c4 = arith.constant 4 : index
    %c0_40 = arith.constant 0 : index
    %46 = vector.load %arg12[%c0_39, %c4, %c0_40] : memref<2x8x32xf32, #tpu.memory_space<vmem>>, vector<2x1x32xf32>
    %47 = vector.shape_cast %46 : vector<2x1x32xf32> to vector<2x32xf32>
    %cst_41 = arith.constant dense<0.000000e+00> : vector<2x32xf32>
    %48 = tpu.matmul %42, %12, %cst_41 {dimension_numbers = #tpu.dot_dimension_numbers<[1], [0], [0], [1], [0, 0, 1, 1], [], []>} : vector<2x32xf32>, vector<32x32xf32>, vector<2x32xf32> -> vector<2x32xf32>
    %49 = arith.addf %47, %48 : vector<2x32xf32>
    %50 = math.tanh %49 : vector<2x32xf32>
    %c0_42 = arith.constant 0 : index
    %c4_43 = arith.constant 4 : index
    %c0_44 = arith.constant 0 : index
    %51 = vector.load %arg10[%c0_42, %c4_43, %c0_44] : memref<2x8x32xf32, #tpu.memory_space<vmem>>, vector<2x1x32xf32>
    %52 = vector.shape_cast %51 : vector<2x1x32xf32> to vector<2x32xf32>
    %53 = vector.shape_cast %50 : vector<2x32xf32> to vector<2x1x32xf32>
    tpu.vector_store %arg10[%c0_42, %c4_43, %c0_44], %53 {strides = array<i32>} : memref<2x8x32xf32, #tpu.memory_space<vmem>>, vector<2x1x32xf32>,
    %c0_45 = arith.constant 0 : index
    %c5 = arith.constant 5 : index
    %c0_46 = arith.constant 0 : index
    %54 = vector.load %arg12[%c0_45, %c5, %c0_46] : memref<2x8x32xf32, #tpu.memory_space<vmem>>, vector<2x1x32xf32>
    %55 = vector.shape_cast %54 : vector<2x1x32xf32> to vector<2x32xf32>
    %cst_47 = arith.constant dense<0.000000e+00> : vector<2x32xf32>
    %56 = tpu.matmul %50, %12, %cst_47 {dimension_numbers = #tpu.dot_dimension_numbers<[1], [0], [0], [1], [0, 0, 1, 1], [], []>} : vector<2x32xf32>, vector<32x32xf32>, vector<2x32xf32> -> vector<2x32xf32>
    %57 = arith.addf %55, %56 : vector<2x32xf32>
    %58 = math.tanh %57 : vector<2x32xf32>
    %c0_48 = arith.constant 0 : index
    %c5_49 = arith.constant 5 : index
    %c0_50 = arith.constant 0 : index
    %59 = vector.load %arg10[%c0_48, %c5_49, %c0_50] : memref<2x8x32xf32, #tpu.memory_space<vmem>>, vector<2x1x32xf32>
    %60 = vector.shape_cast %59 : vector<2x1x32xf32> to vector<2x32xf32>
    %61 = vector.shape_cast %58 : vector<2x32xf32> to vector<2x1x32xf32>
    tpu.vector_store %arg10[%c0_48, %c5_49, %c0_50], %61 {strides = array<i32>} : memref<2x8x32xf32, #tpu.memory_space<vmem>>, vector<2x1x32xf32>,
    %c0_51 = arith.constant 0 : index
    %c6 = arith.constant 6 : index
    %c0_52 = arith.constant 0 : index
    %62 = vector.load %arg12[%c0_51, %c6, %c0_52] : memref<2x8x32xf32, #tpu.memory_space<vmem>>, vector<2x1x32xf32>
    %63 = vector.shape_cast %62 : vector<2x1x32xf32> to vector<2x32xf32>
    %cst_53 = arith.constant dense<0.000000e+00> : vector<2x32xf32>
    %64 = tpu.matmul %58, %12, %cst_53 {dimension_numbers = #tpu.dot_dimension_numbers<[1], [0], [0], [1], [0, 0, 1, 1], [], []>} : vector<2x32xf32>, vector<32x32xf32>, vector<2x32xf32> -> vector<2x32xf32>
    %65 = arith.addf %63, %64 : vector<2x32xf32>
    %66 = math.tanh %65 : vector<2x32xf32>
    %c0_54 = arith.constant 0 : index
    %c6_55 = arith.constant 6 : index
    %c0_56 = arith.constant 0 : index
    %67 = vector.load %arg10[%c0_54, %c6_55, %c0_56] : memref<2x8x32xf32, #tpu.memory_space<vmem>>, vector<2x1x32xf32>
    %68 = vector.shape_cast %67 : vector<2x1x32xf32> to vector<2x32xf32>
    %69 = vector.shape_cast %66 : vector<2x32xf32> to vector<2x1x32xf32>
    tpu.vector_store %arg10[%c0_54, %c6_55, %c0_56], %69 {strides = array<i32>} : memref<2x8x32xf32, #tpu.memory_space<vmem>>, vector<2x1x32xf32>,
    %c0_57 = arith.constant 0 : index
    %c7 = arith.constant 7 : index
    %c0_58 = arith.constant 0 : index
    %70 = vector.load %arg12[%c0_57, %c7, %c0_58] : memref<2x8x32xf32, #tpu.memory_space<vmem>>, vector<2x1x32xf32>
    %71 = vector.shape_cast %70 : vector<2x1x32xf32> to vector<2x32xf32>
    %cst_59 = arith.constant dense<0.000000e+00> : vector<2x32xf32>
    %72 = tpu.matmul %66, %12, %cst_59 {dimension_numbers = #tpu.dot_dimension_numbers<[1], [0], [0], [1], [0, 0, 1, 1], [], []>} : vector<2x32xf32>, vector<32x32xf32>, vector<2x32xf32> -> vector<2x32xf32>
    %73 = arith.addf %71, %72 : vector<2x32xf32>
    %74 = math.tanh %73 : vector<2x32xf32>
    %c0_60 = arith.constant 0 : index
    %c7_61 = arith.constant 7 : index
    %c0_62 = arith.constant 0 : index
    %75 = vector.load %arg10[%c0_60, %c7_61, %c0_62] : memref<2x8x32xf32, #tpu.memory_space<vmem>>, vector<2x1x32xf32>
    %76 = vector.shape_cast %75 : vector<2x1x32xf32> to vector<2x32xf32>
    %77 = vector.shape_cast %74 : vector<2x32xf32> to vector<2x1x32xf32>
    tpu.vector_store %arg10[%c0_60, %c7_61, %c0_62], %77 {strides = array<i32>} : memref<2x8x32xf32, #tpu.memory_space<vmem>>, vector<2x1x32xf32>,
    %c0_63 = arith.constant 0 : index
    %c0_64 = arith.constant 0 : index
    %78 = vector.load %arg11[%c0_63, %c0_64] : memref<2x32xf32, #tpu.memory_space<vmem>>, vector<2x32xf32>
    tpu.vector_store %arg11[%c0_63, %c0_64], %74 {strides = array<i32>} : memref<2x32xf32, #tpu.memory_space<vmem>>, vector<2x32xf32>,
    %c0_65 = arith.constant 0 : index
    %c0_66 = arith.constant 0 : index
    %c0_67 = arith.constant 0 : index
    %79 = vector.load %arg10[%c0_65, %c0_66, %c0_67] : memref<2x8x32xf32, #tpu.memory_space<vmem>>, vector<2x8x32xf32>
    %80 = vector.shape_cast %79 : vector<2x8x32xf32> to vector<16x32xf32>
    %c0_68 = arith.constant 0 : index
    %c0_69 = arith.constant 0 : index
    %81 = vector.load %arg7[%c0_68, %c0_69] : memref<32x4xf32, #tpu.memory_space<vmem>>, vector<32x4xf32>
    %cst_70 = arith.constant dense<0.000000e+00> : vector<16x4xf32>
    %82 = tpu.matmul %80, %81, %cst_70 {dimension_numbers = #tpu.dot_dimension_numbers<[1], [0], [0], [1], [0, 0, 1, 1], [], []>} : vector<16x32xf32>, vector<32x4xf32>, vector<16x4xf32> -> vector<16x4xf32>
    %c0_71 = arith.constant 0 : index
    %c0_72 = arith.constant 0 : index
    %83 = vector.load %arg8[%c0_71, %c0_72] : memref<1x4xf32, #tpu.memory_space<vmem>>, vector<1x4xf32>
    %84 = vector.broadcast %83 : vector<1x4xf32> to vector<16x4xf32>
    %85 = arith.addf %82, %84 : vector<16x4xf32>
    %86 = vector.shape_cast %85 : vector<16x4xf32> to vector<2x8x4xf32>
    %c0_73 = arith.constant 0 : index
    %c0_74 = arith.constant 0 : index
    %c0_75 = arith.constant 0 : index
    %87 = vector.load %arg9[%c0_73, %c0_74, %c0_75] : memref<2x8x4xf32, #tpu.memory_space<vmem>>, vector<2x8x4xf32>
    tpu.vector_store %arg9[%c0_73, %c0_74, %c0_75], %86 {strides = array<i32>} : memref<2x8x4xf32, #tpu.memory_space<vmem>>, vector<2x8x4xf32>,
    return
  }
  func.func @transform_0(%arg0: i32, %arg1: i32) -> (i32, i32, i32) {
    %c0_i32 = arith.constant 0 : i32
    %c0_i32_0 = arith.constant 0 : i32
    return %arg0, %arg1, %c0_i32 : i32, i32, i32
  }
  func.func @transform_1(%arg0: i32, %arg1: i32) -> (i32, i32) {
    %c0_i32 = arith.constant 0 : i32
    %c0_i32_0 = arith.constant 0 : i32
    return %arg0, %c0_i32 : i32, i32
  }
  func.func @transform_2(%arg0: i32, %arg1: i32) -> (i32, i32) {
    %c0_i32 = arith.constant 0 : i32
    %c0_i32_0 = arith.constant 0 : i32
    %c0_i32_1 = arith.constant 0 : i32
    return %c0_i32, %c0_i32_0 : i32, i32
  }
  func.func @transform_3(%arg0: i32, %arg1: i32) -> (i32, i32) {
    %c0_i32 = arith.constant 0 : i32
    %c0_i32_0 = arith.constant 0 : i32
    %c0_i32_1 = arith.constant 0 : i32
    return %c0_i32, %c0_i32_0 : i32, i32
  }
  func.func @transform_4(%arg0: i32, %arg1: i32) -> (i32, i32) {
    %c0_i32 = arith.constant 0 : i32
    %c0_i32_0 = arith.constant 0 : i32
    %c0_i32_1 = arith.constant 0 : i32
    return %c0_i32, %c0_i32_0 : i32, i32
  }
  func.func @transform_5(%arg0: i32, %arg1: i32) -> (i32, i32) {
    %c0_i32 = arith.constant 0 : i32
    %c0_i32_0 = arith.constant 0 : i32
    %c0_i32_1 = arith.constant 0 : i32
    return %c0_i32, %c0_i32_0 : i32, i32
  }
  func.func @transform_6(%arg0: i32, %arg1: i32) -> (i32, i32) {
    %c0_i32 = arith.constant 0 : i32
    %c0_i32_0 = arith.constant 0 : i32
    %c0_i32_1 = arith.constant 0 : i32
    return %c0_i32, %c0_i32_0 : i32, i32
  }
  func.func @transform_7(%arg0: i32, %arg1: i32) -> (i32, i32, i32) {
    %c0_i32 = arith.constant 0 : i32
    %c0_i32_0 = arith.constant 0 : i32
    return %arg0, %arg1, %c0_i32 : i32, i32, i32
  }
  func.func @transform_8(%arg0: i32, %arg1: i32) -> (i32, i32, i32) {
    %c0_i32 = arith.constant 0 : i32
    %c0_i32_0 = arith.constant 0 : i32
    return %arg0, %arg1, %c0_i32 : i32, i32, i32
  }
}

</mosaic_0001>

<llo_original>
// kernel: _rnn_forward_impl.1
$region0: #{_rnn_forward_impl.1}
  #allocation0 [shape = 'u32[]', space=smem, size = 0x4, offset = 0x4, fixed_abs, tag = 'smem constant byte address 0x4 - core index']
  #allocation1 [shape = 'u32[144,128]{1,0:T(1,128)}', space=vmem, size = 0x12000, scoped, tag = 'internal scratch']
  #allocation2 [shape = 'f32[2,32]{1,0:T(2,128)}', space=vmem, size = 0x400, scoped, tag = 'scratch operand']
  #allocation3 [shape = 'f32[2,8,32]{2,1,0:T(8,128)}', space=vmem, size = 0x2000, scoped, tag = 'scratch operand']
  %s0 = inlined_call_operand.vmem [shape: f32[2,8,4], index: 0, kind: input, shape index: {}]
  %s1 = inlined_call_operand.vmem [shape: f32[2,32], index: 1, kind: input, shape index: {}]
  %s2 = inlined_call_operand.vmem [shape: f32[4,32], index: 2, kind: input, shape index: {}]
  %s3 = inlined_call_operand.vmem [shape: f32[32,32], index: 3, kind: input, shape index: {}]
  %s4 = inlined_call_operand.vmem [shape: f32[1,32], index: 4, kind: input, shape index: {}]
  %s5 = inlined_call_operand.vmem [shape: f32[32,4], index: 5, kind: input, shape index: {}]
  %s6 = inlined_call_operand.vmem [shape: f32[1,4], index: 6, kind: input, shape index: {}]
  %s7 = inlined_call_operand.vmem [shape: f32[2,8,4], index: 7, kind: output, shape index: {0}]
  %s8 = inlined_call_operand.hbm [shape: f32[2,8,32], index: 8, kind: output, shape index: {1}]
  %9 = xla_tuple %s7, %s8
  %s10 = sld [smem:[#allocation0]]
  $region50: #{_rnn_forward_impl.1} parent=0
    _
  %s12 = ssub.s32 1, %s10
  %s13 = scalar_select 0, %s12, %s10
  $region1: #{_rnn_forward_impl.1} parent=0
    #allocation4 [shape = 'u8[8192]{0}', space=vmem, size = 0x2000, scoped, tag = 'output window, operand 1, single buffered']
    #allocation5 [shape = 's32[1]{0}', space=sflag, size = 0x4, scoped, tag = 'scoped memory for _rnn_forward_impl.1']
    %14 = vsyncpa [#allocation5], 0
    // Predicated region
    $region2: #{_rnn_forward_impl.1} parent=1 // pred_check
      _
    $region3: #{_rnn_forward_impl.1} parent=1 // pred_check_branch
      %16 = sbr.rel (0) target = $region5
    $region4: #{_rnn_forward_impl.1} parent=1 // pred_region
      _
    $region5: #{_rnn_forward_impl.1} parent=1 // pred_fallthru
      _
    // Predicated region
    $region6: #{_rnn_forward_impl.1} parent=1 // pred_check
      _
    $region7: #{_rnn_forward_impl.1} parent=1 // pred_check_branch
      %18 = sbr.rel (0) target = $region9
    $region8: #{_rnn_forward_impl.1} parent=1 // pred_region
      _
    $region9: #{_rnn_forward_impl.1} parent=1 // pred_fallthru
      _
    // Predicated region
    $region10: #{_rnn_forward_impl.1} parent=1 // pred_check
      _
    $region11: #{_rnn_forward_impl.1} parent=1 // pred_check_branch
      %20 = sbr.rel (0) target = $region13
    $region12: #{_rnn_forward_impl.1} parent=1 // pred_region
      _
    $region13: #{_rnn_forward_impl.1} parent=1 // pred_fallthru
      _
    // Predicated region
    $region14: #{_rnn_forward_impl.1} parent=1 // pred_check
      _
    $region15: #{_rnn_forward_impl.1} parent=1 // pred_check_branch
      %22 = sbr.rel (0) target = $region17
    $region16: #{_rnn_forward_impl.1} parent=1 // pred_region
      _
    $region17: #{_rnn_forward_impl.1} parent=1 // pred_fallthru
      _
    // Predicated region
    $region18: #{_rnn_forward_impl.1} parent=1 // pred_check
      _
    $region19: #{_rnn_forward_impl.1} parent=1 // pred_check_branch
      %24 = sbr.rel (0) target = $region21
    $region20: #{_rnn_forward_impl.1} parent=1 // pred_region
      _
    $region21: #{_rnn_forward_impl.1} parent=1 // pred_fallthru
      _
    // Predicated region
    $region22: #{_rnn_forward_impl.1} parent=1 // pred_check
      _
    $region23: #{_rnn_forward_impl.1} parent=1 // pred_check_branch
      %26 = sbr.rel (0) target = $region25
    $region24: #{_rnn_forward_impl.1} parent=1 // pred_region
      _
    $region25: #{_rnn_forward_impl.1} parent=1 // pred_fallthru
      _
    // Predicated region
    $region26: #{_rnn_forward_impl.1} parent=1 // pred_check
      _
    $region27: #{_rnn_forward_impl.1} parent=1 // pred_check_branch
      %28 = sbr.rel (0) target = $region29
    $region28: #{_rnn_forward_impl.1} parent=1 // pred_region
      _
    $region29: #{_rnn_forward_impl.1} parent=1 // pred_fallthru
      _
    %p29 = scmp.eq.s32.totalorder 0, 0
    // Predicated region
    $region30: #{_rnn_forward_impl.1} parent=1 // pred_check
      %p30 = pneg %p29
    $region31: #{_rnn_forward_impl.1} parent=1 // pred_check_branch
      %32 = sbr.rel (%p30) target = $region33
    $region32: #{_rnn_forward_impl.1} parent=1 // pred_region
      %v33 = vld [vmem:[%s1] sm:$0x3]
      %vm34 = vcmask 254976
      %35 = vst.msk [vmem:[#allocation2] sm:$0x3] %vm34, %v33
    $region33: #{_rnn_forward_impl.1} parent=1 // pred_fallthru
      _
    %v36 = vld [vmem:[%s0] sm:$0xff]
    %v37 = vld [vmem:[%s0 + $0x8] sm:$0xff]
    %v38 = vld [vmem:[%s2] sm:$0xf]
    %v39 = vld [vmem:[%s4] sm:$0x1]
    %v41 = vlaneseq
    %v42 = vshrl.u32 %v41, 7
    %v43 = vsub.s32 0, %v42
    %v44 = vrot.slane %v39, %v43
    %vm46 = vcmask 31744
    %v48 = vsel %vm46, %v36, 0
    %v51 = vsel %vm46, %v37, 0
    %vm53 = vcmask 1043456
    %v55 = vsel %vm53, %v38, 0
    %57 = vmatprep.subr.mxu0 0.0
    %58 = vmatpush1.msra.mxu0 %v55
    %59 = vmatprep.subr.mxu0 0.0
    %60 = vmatpush1.msra.mxu0 0.0
    %61 = vmatprep.subr.mxu0 0.0
    %62 = vmatpush1.msra.mxu0 0.0
    %63 = vmatprep.subr.mxu0 0.0
    %64 = vmatpush1.msra.mxu0 0.0
    %65 = vmatprep.subr.mxu0 0.0
    %66 = vmatpush1.msra.mxu0 0.0
    %67 = vmatprep.subr.mxu0 0.0
    %68 = vmatpush1.msra.mxu0 0.0
    %69 = vmatprep.subr.mxu0 0.0
    %70 = vmatpush1.msra.mxu0 0.0
    %71 = vmatprep.subr.mxu0 0.0
    %72 = vmatpush1.msra.mxu0 0.0
    %73 = vmatprep.subr.mxu0 0.0
    %74 = vmatpush1.msra.mxu0 0.0
    %75 = vmatprep.subr.mxu0 0.0
    %76 = vmatpush1.msra.mxu0 0.0
    %77 = vmatprep.subr.mxu0 0.0
    %78 = vmatpush1.msra.mxu0 0.0
    %79 = vmatprep.subr.mxu0 0.0
    %80 = vmatpush1.msra.mxu0 0.0
    %81 = vmatprep.subr.mxu0 0.0
    %82 = vmatpush1.msra.mxu0 0.0
    %83 = vmatprep.subr.mxu0 0.0
    %84 = vmatpush1.msra.mxu0 0.0
    %85 = vmatprep.subr.mxu0 0.0
    %86 = vmatpush1.msra.mxu0 0.0
    %87 = vmatprep.subr.mxu0 0.0
    %88 = vmatpush1.msra.mxu0 0.0
    %89 = vmatprep.subr.mxu0 0.0
    %90 = vmatpush1.msra.mxu0 0.0
    %91 = vmatprep.subr.mxu0 0.0
    %92 = vmatpush1.msra.mxu0 0.0
    %93 = vmatprep.subr.mxu0 0.0
    %94 = vmatpush1.msra.mxu0 0.0
    %95 = vmatprep.subr.mxu0 0.0
    %96 = vmatpush1.msra.mxu0 0.0
    %97 = vmatprep.subr.mxu0 0.0
    %98 = vmatpush1.msra.mxu0 0.0
    %99 = vmatprep.subr.mxu0 0.0
    %100 = vmatpush1.msra.mxu0 0.0
    %101 = vmatprep.subr.mxu0 0.0
    %102 = vmatpush1.msra.mxu0 0.0
    %103 = vmatprep.subr.mxu0 0.0
    %104 = vmatpush1.msra.mxu0 0.0
    %105 = vmatprep.subr.mxu0 0.0
    %106 = vmatpush1.msra.mxu0 0.0
    %107 = vmatprep.subr.mxu0 0.0
    %108 = vmatpush1.msra.mxu0 0.0
    %109 = vmatprep.subr.mxu0 0.0
    %110 = vmatpush1.msra.mxu0 0.0
    %111 = vmatprep.subr.mxu0 0.0
    %112 = vmatpush1.msra.mxu0 0.0
    %113 = vmatprep.subr.mxu0 0.0
    %114 = vmatpush1.msra.mxu0 0.0
    %115 = vmatprep.subr.mxu0 0.0
    %116 = vmatpush1.msra.mxu0 0.0
    %117 = vmatprep.subr.mxu0 0.0
    %118 = vmatpush1.msra.mxu0 0.0
    %119 = vmatprep.subr.mxu0 0.0
    %120 = vmatpush1.msra.mxu0 0.0
    %121 = vmatprep.mubr.f32.mxu0 0.0
    %122 = vmatmul.mubr.f32.gmra.mrb[0].mxu0 %v48
    %v123 = vpop.f32.mrb[0].mxu0
    %v124 = vadd.f32 %v44, %v123
    %v125 = vpop.f32.mrb[0].mxu0
    %126 = vmatprep.mubr.f32.mxu0 0.0
    %127 = vmatmul.mubr.f32.gmra.mrb[0].mxu0 %v51
    %v128 = vpop.f32.mrb[0].mxu0
    %v129 = vadd.f32 %v44, %v128
    %v130 = vpop.f32.mrb[0].mxu0
    %131 = vdwg.mxu0
    %vm132 = vcmask 261120
    %133 = vst.msk [vmem:[#allocation3] sm:$0xff] %vm132, %v124
    %134 = vst.msk [vmem:[#allocation3 + $0x8] sm:$0xff] %vm132, %v129
    %v135 = vld [vmem:[%s3] sm:$0xff]
    %v136 = vld [vmem:[%s3 + $0x8] sm:$0xff]
    %v137 = vld [vmem:[%s3 + $0x10] sm:$0xff]
    %v138 = vld [vmem:[%s3 + $0x18] sm:$0xff]
    %v139 = vld [vmem:[#allocation2] sm:$0x3]
    %v140 = vld [vmem:[#allocation3] sm:$0x1]
    %v141 = vld [vmem:[#allocation3 + $0x8] sm:$0x1]
    %v143 = vsel %vm132, %v139, 0
    %145 = vmatprep.subr.mxu0 0.0
    %146 = vmatpush1.msra.mxu0 %v135
    %147 = vmatprep.subr.mxu0 0.0
    %148 = vmatpush1.msra.mxu0 %v136
    %149 = vmatprep.subr.mxu0 0.0
    %150 = vmatpush1.msra.mxu0 %v137
    %151 = vmatprep.subr.mxu0 0.0
    %152 = vmatpush1.msra.mxu0 %v138
    %153 = vmatprep.subr.mxu0 0.0
    %154 = vmatpush1.msra.mxu0 0.0
    %155 = vmatprep.subr.mxu0 0.0
    %156 = vmatpush1.msra.mxu0 0.0
    %157 = vmatprep.subr.mxu0 0.0
    %158 = vmatpush1.msra.mxu0 0.0
    %159 = vmatprep.subr.mxu0 0.0
    %160 = vmatpush1.msra.mxu0 0.0
    %161 = vmatprep.subr.mxu0 0.0
    %162 = vmatpush1.msra.mxu0 0.0
    %163 = vmatprep.subr.mxu0 0.0
    %164 = vmatpush1.msra.mxu0 0.0
    %165 = vmatprep.subr.mxu0 0.0
    %166 = vmatpush1.msra.mxu0 0.0
    %167 = vmatprep.subr.mxu0 0.0
    %168 = vmatpush1.msra.mxu0 0.0
    %169 = vmatprep.subr.mxu0 0.0
    %170 = vmatpush1.msra.mxu0 0.0
    %171 = vmatprep.subr.mxu0 0.0
    %172 = vmatpush1.msra.mxu0 0.0
    %173 = vmatprep.subr.mxu0 0.0
    %174 = vmatpush1.msra.mxu0 0.0
    %175 = vmatprep.subr.mxu0 0.0
    %176 = vmatpush1.msra.mxu0 0.0
    %177 = vmatprep.subr.mxu0 0.0
    %178 = vmatpush1.msra.mxu0 0.0
    %179 = vmatprep.subr.mxu0 0.0
    %180 = vmatpush1.msra.mxu0 0.0
    %181 = vmatprep.subr.mxu0 0.0
    %182 = vmatpush1.msra.mxu0 0.0
    %183 = vmatprep.subr.mxu0 0.0
    %184 = vmatpush1.msra.mxu0 0.0
    %185 = vmatprep.subr.mxu0 0.0
    %186 = vmatpush1.msra.mxu0 0.0
    %187 = vmatprep.subr.mxu0 0.0
    %188 = vmatpush1.msra.mxu0 0.0
    %189 = vmatprep.subr.mxu0 0.0
    %190 = vmatpush1.msra.mxu0 0.0
    %191 = vmatprep.subr.mxu0 0.0
    %192 = vmatpush1.msra.mxu0 0.0
    %193 = vmatprep.subr.mxu0 0.0
    %194 = vmatpush1.msra.mxu0 0.0
    %195 = vmatprep.subr.mxu0 0.0
    %196 = vmatpush1.msra.mxu0 0.0
    %197 = vmatprep.subr.mxu0 0.0
    %198 = vmatpush1.msra.mxu0 0.0
    %199 = vmatprep.subr.mxu0 0.0
    %200 = vmatpush1.msra.mxu0 0.0
    %201 = vmatprep.subr.mxu0 0.0
    %202 = vmatpush1.msra.mxu0 0.0
    %203 = vmatprep.subr.mxu0 0.0
    %204 = vmatpush1.msra.mxu0 0.0
    %205 = vmatprep.subr.mxu0 0.0
    %206 = vmatpush1.msra.mxu0 0.0
    %207 = vmatprep.subr.mxu0 0.0
    %208 = vmatpush1.msra.mxu0 0.0
    %209 = vmatprep.mubr.f32.mxu0 0.0
    %210 = vmatmul.mubr.f32.gmra.mrb[0].mxu0 %v143
    %v211 = vpop.f32.mrb[0].mxu0
    %v212 = vadd.f32 0.0, %v211
    %v213 = vpop.f32.mrb[0].mxu0
    %214 = vdwg.mxu0
    %v216 = vrot.slane %v212, 1
    %v219 = vadd.f32 %v140, %v212
    %v220 = vadd.f32 %v141, %v216
    %v221 = vtanh.pop %v219
    %v222 = vtanh.pop %v220
    %vm223 = vcmask 253952
    %224 = vst.msk [vmem:[#allocation4] sm:$0x1] %vm223, %v221
    %225 = vst.msk [vmem:[#allocation4 + $0x8] sm:$0x1] %vm223, %v222
    %v226 = vld [vmem:[#allocation3 + $0x1] sm:$0x1]
    %v227 = vld [vmem:[#allocation3 + $0x9] sm:$0x1]
    %v230 = vrot.slane %v222, 7
    %vm231 = vcmask 1041409
    %v232 = vsel %vm231, %v230, %v221
    %v233 = vsel %vm132, %v232, 0
    %235 = vmatprep.subr.mxu0 0.0
    %236 = vmatpush1.msra.mxu0 %v135
    %237 = vmatprep.subr.mxu0 0.0
    %238 = vmatpush1.msra.mxu0 %v136
    %239 = vmatprep.subr.mxu0 0.0
    %240 = vmatpush1.msra.mxu0 %v137
    %241 = vmatprep.subr.mxu0 0.0
    %242 = vmatpush1.msra.mxu0 %v138
    %243 = vmatprep.subr.mxu0 0.0
    %244 = vmatpush1.msra.mxu0 0.0
    %245 = vmatprep.subr.mxu0 0.0
    %246 = vmatpush1.msra.mxu0 0.0
    %247 = vmatprep.subr.mxu0 0.0
    %248 = vmatpush1.msra.mxu0 0.0
    %249 = vmatprep.subr.mxu0 0.0
    %250 = vmatpush1.msra.mxu0 0.0
    %251 = vmatprep.subr.mxu0 0.0
    %252 = vmatpush1.msra.mxu0 0.0
    %253 = vmatprep.subr.mxu0 0.0
    %254 = vmatpush1.msra.mxu0 0.0
    %255 = vmatprep.subr.mxu0 0.0
    %256 = vmatpush1.msra.mxu0 0.0
    %257 = vmatprep.subr.mxu0 0.0
    %258 = vmatpush1.msra.mxu0 0.0
    %259 = vmatprep.subr.mxu0 0.0
    %260 = vmatpush1.msra.mxu0 0.0
    %261 = vmatprep.subr.mxu0 0.0
    %262 = vmatpush1.msra.mxu0 0.0
    %263 = vmatprep.subr.mxu0 0.0
    %264 = vmatpush1.msra.mxu0 0.0
    %265 = vmatprep.subr.mxu0 0.0
    %266 = vmatpush1.msra.mxu0 0.0
    %267 = vmatprep.subr.mxu0 0.0
    %268 = vmatpush1.msra.mxu0 0.0
    %269 = vmatprep.subr.mxu0 0.0
    %270 = vmatpush1.msra.mxu0 0.0
    %271 = vmatprep.subr.mxu0 0.0
    %272 = vmatpush1.msra.mxu0 0.0
    %273 = vmatprep.subr.mxu0 0.0
    %274 = vmatpush1.msra.mxu0 0.0
    %275 = vmatprep.subr.mxu0 0.0
    %276 = vmatpush1.msra.mxu0 0.0
    %277 = vmatprep.subr.mxu0 0.0
    %278 = vmatpush1.msra.mxu0 0.0
    %279 = vmatprep.subr.mxu0 0.0
    %280 = vmatpush1.msra.mxu0 0.0
    %281 = vmatprep.subr.mxu0 0.0
    %282 = vmatpush1.msra.mxu0 0.0
    %283 = vmatprep.subr.mxu0 0.0
    %284 = vmatpush1.msra.mxu0 0.0
    %285 = vmatprep.subr.mxu0 0.0
    %286 = vmatpush1.msra.mxu0 0.0
    %287 = vmatprep.subr.mxu0 0.0
    %288 = vmatpush1.msra.mxu0 0.0
    %289 = vmatprep.subr.mxu0 0.0
    %290 = vmatpush1.msra.mxu0 0.0
    %291 = vmatprep.subr.mxu0 0.0
    %292 = vmatpush1.msra.mxu0 0.0
    %293 = vmatprep.subr.mxu0 0.0
    %294 = vmatpush1.msra.mxu0 0.0
    %295 = vmatprep.subr.mxu0 0.0
    %296 = vmatpush1.msra.mxu0 0.0
    %297 = vmatprep.subr.mxu0 0.0
    %298 = vmatpush1.msra.mxu0 0.0
    %299 = vmatprep.mubr.f32.mxu0 0.0
    %300 = vmatmul.mubr.f32.gmra.mrb[0].mxu0 %v233
    %v301 = vpop.f32.mrb[0].mxu0
    %v302 = vadd.f32 0.0, %v301
    %v303 = vpop.f32.mrb[0].mxu0
    %304 = vdwg.mxu0
    %v306 = vrot.slane %v302, 1
    %v309 = vadd.f32 %v226, %v302
    %v310 = vadd.f32 %v227, %v306
    %v311 = vtanh.pop %v309
    %v312 = vtanh.pop %v310
    %313 = vst.msk [vmem:[#allocation4 + $0x1] sm:$0x1] %vm223, %v311
    %314 = vst.msk [vmem:[#allocation4 + $0x9] sm:$0x1] %vm223, %v312
    %v315 = vld [vmem:[#allocation3 + $0x2] sm:$0x1]
    %v316 = vld [vmem:[#allocation3 + $0xa] sm:$0x1]
    %v319 = vrot.slane %v312, 7
    %v320 = vsel %vm231, %v319, %v311
    %v321 = vsel %vm132, %v320, 0
    %323 = vmatprep.subr.mxu0 0.0
    %324 = vmatpush1.msra.mxu0 %v135
    %325 = vmatprep.subr.mxu0 0.0
    %326 = vmatpush1.msra.mxu0 %v136
    %327 = vmatprep.subr.mxu0 0.0
    %328 = vmatpush1.msra.mxu0 %v137
    %329 = vmatprep.subr.mxu0 0.0
    %330 = vmatpush1.msra.mxu0 %v138
    %331 = vmatprep.subr.mxu0 0.0
    %332 = vmatpush1.msra.mxu0 0.0
    %333 = vmatprep.subr.mxu0 0.0
    %334 = vmatpush1.msra.mxu0 0.0
    %335 = vmatprep.subr.mxu0 0.0
    %336 = vmatpush1.msra.mxu0 0.0
    %337 = vmatprep.subr.mxu0 0.0
    %338 = vmatpush1.msra.mxu0 0.0
    %339 = vmatprep.subr.mxu0 0.0
    %340 = vmatpush1.msra.mxu0 0.0
    %341 = vmatprep.subr.mxu0 0.0
    %342 = vmatpush1.msra.mxu0 0.0
    %343 = vmatprep.subr.mxu0 0.0
    %344 = vmatpush1.msra.mxu0 0.0
    %345 = vmatprep.subr.mxu0 0.0
    %346 = vmatpush1.msra.mxu0 0.0
    %347 = vmatprep.subr.mxu0 0.0
    %348 = vmatpush1.msra.mxu0 0.0
    %349 = vmatprep.subr.mxu0 0.0
    %350 = vmatpush1.msra.mxu0 0.0
    %351 = vmatprep.subr.mxu0 0.0
    %352 = vmatpush1.msra.mxu0 0.0
    %353 = vmatprep.subr.mxu0 0.0
    %354 = vmatpush1.msra.mxu0 0.0
    %355 = vmatprep.subr.mxu0 0.0
    %356 = vmatpush1.msra.mxu0 0.0
    %357 = vmatprep.subr.mxu0 0.0
    %358 = vmatpush1.msra.mxu0 0.0
    %359 = vmatprep.subr.mxu0 0.0
    %360 = vmatpush1.msra.mxu0 0.0
    %361 = vmatprep.subr.mxu0 0.0
    %362 = vmatpush1.msra.mxu0 0.0
    %363 = vmatprep.subr.mxu0 0.0
    %364 = vmatpush1.msra.mxu0 0.0
    %365 = vmatprep.subr.mxu0 0.0
    %366 = vmatpush1.msra.mxu0 0.0
    %367 = vmatprep.subr.mxu0 0.0
    %368 = vmatpush1.msra.mxu0 0.0
    %369 = vmatprep.subr.mxu0 0.0
    %370 = vmatpush1.msra.mxu0 0.0
    %371 = vmatprep.subr.mxu0 0.0
    %372 = vmatpush1.msra.mxu0 0.0
    %373 = vmatprep.subr.mxu0 0.0
    %374 = vmatpush1.msra.mxu0 0.0
    %375 = vmatprep.subr.mxu0 0.0
    %376 = vmatpush1.msra.mxu0 0.0
    %377 = vmatprep.subr.mxu0 0.0
    %378 = vmatpush1.msra.mxu0 0.0
    %379 = vmatprep.subr.mxu0 0.0
    %380 = vmatpush1.msra.mxu0 0.0
    %381 = vmatprep.subr.mxu0 0.0
    %382 = vmatpush1.msra.mxu0 0.0
    %383 = vmatprep.subr.mxu0 0.0
    %384 = vmatpush1.msra.mxu0 0.0
    %385 = vmatprep.subr.mxu0 0.0
    %386 = vmatpush1.msra.mxu0 0.0
    %387 = vmatprep.mubr.f32.mxu0 0.0
    %388 = vmatmul.mubr.f32.gmra.mrb[0].mxu0 %v321
    %v389 = vpop.f32.mrb[0].mxu0
    %v390 = vadd.f32 0.0, %v389
    %v391 = vpop.f32.mrb[0].mxu0
    %392 = vdwg.mxu0
    %v394 = vrot.slane %v390, 1
    %v397 = vadd.f32 %v315, %v390
    %v398 = vadd.f32 %v316, %v394
    %v399 = vtanh.pop %v397
    %v400 = vtanh.pop %v398
    %401 = vst.msk [vmem:[#allocation4 + $0x2] sm:$0x1] %vm223, %v399
    %402 = vst.msk [vmem:[#allocation4 + $0xa] sm:$0x1] %vm223, %v400
    %v403 = vld [vmem:[#allocation3 + $0x3] sm:$0x1]
    %v404 = vld [vmem:[#allocation3 + $0xb] sm:$0x1]
    %v407 = vrot.slane %v400, 7
    %v408 = vsel %vm231, %v407, %v399
    %v409 = vsel %vm132, %v408, 0
    %411 = vmatprep.subr.mxu0 0.0
    %412 = vmatpush1.msra.mxu0 %v135
    %413 = vmatprep.subr.mxu0 0.0
    %414 = vmatpush1.msra.mxu0 %v136
    %415 = vmatprep.subr.mxu0 0.0
    %416 = vmatpush1.msra.mxu0 %v137
    %417 = vmatprep.subr.mxu0 0.0
    %418 = vmatpush1.msra.mxu0 %v138
    %419 = vmatprep.subr.mxu0 0.0
    %420 = vmatpush1.msra.mxu0 0.0
    %421 = vmatprep.subr.mxu0 0.0
    %422 = vmatpush1.msra.mxu0 0.0
    %423 = vmatprep.subr.mxu0 0.0
    %424 = vmatpush1.msra.mxu0 0.0
    %425 = vmatprep.subr.mxu0 0.0
    %426 = vmatpush1.msra.mxu0 0.0
    %427 = vmatprep.subr.mxu0 0.0
    %428 = vmatpush1.msra.mxu0 0.0
    %429 = vmatprep.subr.mxu0 0.0
    %430 = vmatpush1.msra.mxu0 0.0
    %431 = vmatprep.subr.mxu0 0.0
    %432 = vmatpush1.msra.mxu0 0.0
    %433 = vmatprep.subr.mxu0 0.0
    %434 = vmatpush1.msra.mxu0 0.0
    %435 = vmatprep.subr.mxu0 0.0
    %436 = vmatpush1.msra.mxu0 0.0
    %437 = vmatprep.subr.mxu0 0.0
    %438 = vmatpush1.msra.mxu0 0.0
    %439 = vmatprep.subr.mxu0 0.0
    %440 = vmatpush1.msra.mxu0 0.0
    %441 = vmatprep.subr.mxu0 0.0
    %442 = vmatpush1.msra.mxu0 0.0
    %443 = vmatprep.subr.mxu0 0.0
    %444 = vmatpush1.msra.mxu0 0.0
    %445 = vmatprep.subr.mxu0 0.0
    %446 = vmatpush1.msra.mxu0 0.0
    %447 = vmatprep.subr.mxu0 0.0
    %448 = vmatpush1.msra.mxu0 0.0
    %449 = vmatprep.subr.mxu0 0.0
    %450 = vmatpush1.msra.mxu0 0.0
    %451 = vmatprep.subr.mxu0 0.0
    %452 = vmatpush1.msra.mxu0 0.0
    %453 = vmatprep.subr.mxu0 0.0
    %454 = vmatpush1.msra.mxu0 0.0
    %455 = vmatprep.subr.mxu0 0.0
    %456 = vmatpush1.msra.mxu0 0.0
    %457 = vmatprep.subr.mxu0 0.0
    %458 = vmatpush1.msra.mxu0 0.0
    %459 = vmatprep.subr.mxu0 0.0
    %460 = vmatpush1.msra.mxu0 0.0
    %461 = vmatprep.subr.mxu0 0.0
    %462 = vmatpush1.msra.mxu0 0.0
    %463 = vmatprep.subr.mxu0 0.0
    %464 = vmatpush1.msra.mxu0 0.0
    %465 = vmatprep.subr.mxu0 0.0
    %466 = vmatpush1.msra.mxu0 0.0
    %467 = vmatprep.subr.mxu0 0.0
    %468 = vmatpush1.msra.mxu0 0.0
    %469 = vmatprep.subr.mxu0 0.0
    %470 = vmatpush1.msra.mxu0 0.0
    %471 = vmatprep.subr.mxu0 0.0
    %472 = vmatpush1.msra.mxu0 0.0
    %473 = vmatprep.subr.mxu0 0.0
    %474 = vmatpush1.msra.mxu0 0.0
    %475 = vmatprep.mubr.f32.mxu0 0.0
    %476 = vmatmul.mubr.f32.gmra.mrb[0].mxu0 %v409
    %v477 = vpop.f32.mrb[0].mxu0
    %v478 = vadd.f32 0.0, %v477
    %v479 = vpop.f32.mrb[0].mxu0
    %480 = vdwg.mxu0
    %v482 = vrot.slane %v478, 1
    %v485 = vadd.f32 %v403, %v478
    %v486 = vadd.f32 %v404, %v482
    %v487 = vtanh.pop %v485
    %v488 = vtanh.pop %v486
    %489 = vst.msk [vmem:[#allocation4 + $0x3] sm:$0x1] %vm223, %v487
    %490 = vst.msk [vmem:[#allocation4 + $0xb] sm:$0x1] %vm223, %v488
    %v491 = vld [vmem:[#allocation3 + $0x4] sm:$0x1]
    %v492 = vld [vmem:[#allocation3 + $0xc] sm:$0x1]
    %v495 = vrot.slane %v488, 7
    %v496 = vsel %vm231, %v495, %v487
    %v497 = vsel %vm132, %v496, 0
    %499 = vmatprep.subr.mxu0 0.0
    %500 = vmatpush1.msra.mxu0 %v135
    %501 = vmatprep.subr.mxu0 0.0
    %502 = vmatpush1.msra.mxu0 %v136
    %503 = vmatprep.subr.mxu0 0.0
    %504 = vmatpush1.msra.mxu0 %v137
    %505 = vmatprep.subr.mxu0 0.0
    %506 = vmatpush1.msra.mxu0 %v138
    %507 = vmatprep.subr.mxu0 0.0
    %508 = vmatpush1.msra.mxu0 0.0
    %509 = vmatprep.subr.mxu0 0.0
    %510 = vmatpush1.msra.mxu0 0.0
    %511 = vmatprep.subr.mxu0 0.0
    %512 = vmatpush1.msra.mxu0 0.0
    %513 = vmatprep.subr.mxu0 0.0
    %514 = vmatpush1.msra.mxu0 0.0
    %515 = vmatprep.subr.mxu0 0.0
    %516 = vmatpush1.msra.mxu0 0.0
    %517 = vmatprep.subr.mxu0 0.0
    %518 = vmatpush1.msra.mxu0 0.0
    %519 = vmatprep.subr.mxu0 0.0
    %520 = vmatpush1.msra.mxu0 0.0
    %521 = vmatprep.subr.mxu0 0.0
    %522 = vmatpush1.msra.mxu0 0.0
    %523 = vmatprep.subr.mxu0 0.0
    %524 = vmatpush1.msra.mxu0 0.0
    %525 = vmatprep.subr.mxu0 0.0
    %526 = vmatpush1.msra.mxu0 0.0
    %527 = vmatprep.subr.mxu0 0.0
    %528 = vmatpush1.msra.mxu0 0.0
    %529 = vmatprep.subr.mxu0 0.0
    %530 = vmatpush1.msra.mxu0 0.0
    %531 = vmatprep.subr.mxu0 0.0
    %532 = vmatpush1.msra.mxu0 0.0
    %533 = vmatprep.subr.mxu0 0.0
    %534 = vmatpush1.msra.mxu0 0.0
    %535 = vmatprep.subr.mxu0 0.0
    %536 = vmatpush1.msra.mxu0 0.0
    %537 = vmatprep.subr.mxu0 0.0
    %538 = vmatpush1.msra.mxu0 0.0
    %539 = vmatprep.subr.mxu0 0.0
    %540 = vmatpush1.msra.mxu0 0.0
    %541 = vmatprep.subr.mxu0 0.0
    %542 = vmatpush1.msra.mxu0 0.0
    %543 = vmatprep.subr.mxu0 0.0
    %544 = vmatpush1.msra.mxu0 0.0
    %545 = vmatprep.subr.mxu0 0.0
    %546 = vmatpush1.msra.mxu0 0.0
    %547 = vmatprep.subr.mxu0 0.0
    %548 = vmatpush1.msra.mxu0 0.0
    %549 = vmatprep.subr.mxu0 0.0
    %550 = vmatpush1.msra.mxu0 0.0
    %551 = vmatprep.subr.mxu0 0.0
    %552 = vmatpush1.msra.mxu0 0.0
    %553 = vmatprep.subr.mxu0 0.0
    %554 = vmatpush1.msra.mxu0 0.0
    %555 = vmatprep.subr.mxu0 0.0
    %556 = vmatpush1.msra.mxu0 0.0
    %557 = vmatprep.subr.mxu0 0.0
    %558 = vmatpush1.msra.mxu0 0.0
    %559 = vmatprep.subr.mxu0 0.0
    %560 = vmatpush1.msra.mxu0 0.0
    %561 = vmatprep.subr.mxu0 0.0
    %562 = vmatpush1.msra.mxu0 0.0
    %563 = vmatprep.mubr.f32.mxu0 0.0
    %564 = vmatmul.mubr.f32.gmra.mrb[0].mxu0 %v497
    %v565 = vpop.f32.mrb[0].mxu0
    %v566 = vadd.f32 0.0, %v565
    %v567 = vpop.f32.mrb[0].mxu0
    %568 = vdwg.mxu0
    %v570 = vrot.slane %v566, 1
    %v573 = vadd.f32 %v491, %v566
    %v574 = vadd.f32 %v492, %v570
    %v575 = vtanh.pop %v573
    %v576 = vtanh.pop %v574
    %577 = vst.msk [vmem:[#allocation4 + $0x4] sm:$0x1] %vm223, %v575
    %578 = vst.msk [vmem:[#allocation4 + $0xc] sm:$0x1] %vm223, %v576
    %v579 = vld [vmem:[#allocation3 + $0x5] sm:$0x1]
    %v580 = vld [vmem:[#allocation3 + $0xd] sm:$0x1]
    %v583 = vrot.slane %v576, 7
    %v584 = vsel %vm231, %v583, %v575
    %v585 = vsel %vm132, %v584, 0
    %587 = vmatprep.subr.mxu0 0.0
    %588 = vmatpush1.msra.mxu0 %v135
    %589 = vmatprep.subr.mxu0 0.0
    %590 = vmatpush1.msra.mxu0 %v136
    %591 = vmatprep.subr.mxu0 0.0
    %592 = vmatpush1.msra.mxu0 %v137
    %593 = vmatprep.subr.mxu0 0.0
    %594 = vmatpush1.msra.mxu0 %v138
    %595 = vmatprep.subr.mxu0 0.0
    %596 = vmatpush1.msra.mxu0 0.0
    %597 = vmatprep.subr.mxu0 0.0
    %598 = vmatpush1.msra.mxu0 0.0
    %599 = vmatprep.subr.mxu0 0.0
    %600 = vmatpush1.msra.mxu0 0.0
    %601 = vmatprep.subr.mxu0 0.0
    %602 = vmatpush1.msra.mxu0 0.0
    %603 = vmatprep.subr.mxu0 0.0
    %604 = vmatpush1.msra.mxu0 0.0
    %605 = vmatprep.subr.mxu0 0.0
    %606 = vmatpush1.msra.mxu0 0.0
    %607 = vmatprep.subr.mxu0 0.0
    %608 = vmatpush1.msra.mxu0 0.0
    %609 = vmatprep.subr.mxu0 0.0
    %610 = vmatpush1.msra.mxu0 0.0
    %611 = vmatprep.subr.mxu0 0.0
    %612 = vmatpush1.msra.mxu0 0.0
    %613 = vmatprep.subr.mxu0 0.0
    %614 = vmatpush1.msra.mxu0 0.0
    %615 = vmatprep.subr.mxu0 0.0
    %616 = vmatpush1.msra.mxu0 0.0
    %617 = vmatprep.subr.mxu0 0.0
    %618 = vmatpush1.msra.mxu0 0.0
    %619 = vmatprep.subr.mxu0 0.0
    %620 = vmatpush1.msra.mxu0 0.0
    %621 = vmatprep.subr.mxu0 0.0
    %622 = vmatpush1.msra.mxu0 0.0
    %623 = vmatprep.subr.mxu0 0.0
    %624 = vmatpush1.msra.mxu0 0.0
    %625 = vmatprep.subr.mxu0 0.0
    %626 = vmatpush1.msra.mxu0 0.0
    %627 = vmatprep.subr.mxu0 0.0
    %628 = vmatpush1.msra.mxu0 0.0
    %629 = vmatprep.subr.mxu0 0.0
    %630 = vmatpush1.msra.mxu0 0.0
    %631 = vmatprep.subr.mxu0 0.0
    %632 = vmatpush1.msra.mxu0 0.0
    %633 = vmatprep.subr.mxu0 0.0
    %634 = vmatpush1.msra.mxu0 0.0
    %635 = vmatprep.subr.mxu0 0.0
    %636 = vmatpush1.msra.mxu0 0.0
    %637 = vmatprep.subr.mxu0 0.0
    %638 = vmatpush1.msra.mxu0 0.0
    %639 = vmatprep.subr.mxu0 0.0
    %640 = vmatpush1.msra.mxu0 0.0
    %641 = vmatprep.subr.mxu0 0.0
    %642 = vmatpush1.msra.mxu0 0.0
    %643 = vmatprep.subr.mxu0 0.0
    %644 = vmatpush1.msra.mxu0 0.0
    %645 = vmatprep.subr.mxu0 0.0
    %646 = vmatpush1.msra.mxu0 0.0
    %647 = vmatprep.subr.mxu0 0.0
    %648 = vmatpush1.msra.mxu0 0.0
    %649 = vmatprep.subr.mxu0 0.0
    %650 = vmatpush1.msra.mxu0 0.0
    %651 = vmatprep.mubr.f32.mxu0 0.0
    %652 = vmatmul.mubr.f32.gmra.mrb[0].mxu0 %v585
    %v653 = vpop.f32.mrb[0].mxu0
    %v654 = vadd.f32 0.0, %v653
    %v655 = vpop.f32.mrb[0].mxu0
    %656 = vdwg.mxu0
    %v658 = vrot.slane %v654, 1
    %v661 = vadd.f32 %v579, %v654
    %v662 = vadd.f32 %v580, %v658
    %v663 = vtanh.pop %v661
    %v664 = vtanh.pop %v662
    %665 = vst.msk [vmem:[#allocation4 + $0x5] sm:$0x1] %vm223, %v663
    %666 = vst.msk [vmem:[#allocation4 + $0xd] sm:$0x1] %vm223, %v664
    %v667 = vld [vmem:[#allocation3 + $0x6] sm:$0x1]
    %v668 = vld [vmem:[#allocation3 + $0xe] sm:$0x1]
    %v671 = vrot.slane %v664, 7
    %v672 = vsel %vm231, %v671, %v663
    %v673 = vsel %vm132, %v672, 0
    %675 = vmatprep.subr.mxu0 0.0
    %676 = vmatpush1.msra.mxu0 %v135
    %677 = vmatprep.subr.mxu0 0.0
    %678 = vmatpush1.msra.mxu0 %v136
    %679 = vmatprep.subr.mxu0 0.0
    %680 = vmatpush1.msra.mxu0 %v137
    %681 = vmatprep.subr.mxu0 0.0
    %682 = vmatpush1.msra.mxu0 %v138
    %683 = vmatprep.subr.mxu0 0.0
    %684 = vmatpush1.msra.mxu0 0.0
    %685 = vmatprep.subr.mxu0 0.0
    %686 = vmatpush1.msra.mxu0 0.0
    %687 = vmatprep.subr.mxu0 0.0
    %688 = vmatpush1.msra.mxu0 0.0
    %689 = vmatprep.subr.mxu0 0.0
    %690 = vmatpush1.msra.mxu0 0.0
    %691 = vmatprep.subr.mxu0 0.0
    %692 = vmatpush1.msra.mxu0 0.0
    %693 = vmatprep.subr.mxu0 0.0
    %694 = vmatpush1.msra.mxu0 0.0
    %695 = vmatprep.subr.mxu0 0.0
    %696 = vmatpush1.msra.mxu0 0.0
    %697 = vmatprep.subr.mxu0 0.0
    %698 = vmatpush1.msra.mxu0 0.0
    %699 = vmatprep.subr.mxu0 0.0
    %700 = vmatpush1.msra.mxu0 0.0
    %701 = vmatprep.subr.mxu0 0.0
    %702 = vmatpush1.msra.mxu0 0.0
    %703 = vmatprep.subr.mxu0 0.0
    %704 = vmatpush1.msra.mxu0 0.0
    %705 = vmatprep.subr.mxu0 0.0
    %706 = vmatpush1.msra.mxu0 0.0
    %707 = vmatprep.subr.mxu0 0.0
    %708 = vmatpush1.msra.mxu0 0.0
    %709 = vmatprep.subr.mxu0 0.0
    %710 = vmatpush1.msra.mxu0 0.0
    %711 = vmatprep.subr.mxu0 0.0
    %712 = vmatpush1.msra.mxu0 0.0
    %713 = vmatprep.subr.mxu0 0.0
    %714 = vmatpush1.msra.mxu0 0.0
    %715 = vmatprep.subr.mxu0 0.0
    %716 = vmatpush1.msra.mxu0 0.0
    %717 = vmatprep.subr.mxu0 0.0
    %718 = vmatpush1.msra.mxu0 0.0
    %719 = vmatprep.subr.mxu0 0.0
    %720 = vmatpush1.msra.mxu0 0.0
    %721 = vmatprep.subr.mxu0 0.0
    %722 = vmatpush1.msra.mxu0 0.0
    %723 = vmatprep.subr.mxu0 0.0
    %724 = vmatpush1.msra.mxu0 0.0
    %725 = vmatprep.subr.mxu0 0.0
    %726 = vmatpush1.msra.mxu0 0.0
    %727 = vmatprep.subr.mxu0 0.0
    %728 = vmatpush1.msra.mxu0 0.0
    %729 = vmatprep.subr.mxu0 0.0
    %730 = vmatpush1.msra.mxu0 0.0
    %731 = vmatprep.subr.mxu0 0.0
    %732 = vmatpush1.msra.mxu0 0.0
    %733 = vmatprep.subr.mxu0 0.0
    %734 = vmatpush1.msra.mxu0 0.0
    %735 = vmatprep.subr.mxu0 0.0
    %736 = vmatpush1.msra.mxu0 0.0
    %737 = vmatprep.subr.mxu0 0.0
    %738 = vmatpush1.msra.mxu0 0.0
    %739 = vmatprep.mubr.f32.mxu0 0.0
    %740 = vmatmul.mubr.f32.gmra.mrb[0].mxu0 %v673
    %v741 = vpop.f32.mrb[0].mxu0
    %v742 = vadd.f32 0.0, %v741
    %v743 = vpop.f32.mrb[0].mxu0
    %744 = vdwg.mxu0
    %v746 = vrot.slane %v742, 1
    %v749 = vadd.f32 %v667, %v742
    %v750 = vadd.f32 %v668, %v746
    %v751 = vtanh.pop %v749
    %v752 = vtanh.pop %v750
    %753 = vst.msk [vmem:[#allocation4 + $0x6] sm:$0x1] %vm223, %v751
    %754 = vst.msk [vmem:[#allocation4 + $0xe] sm:$0x1] %vm223, %v752
    %v755 = vld [vmem:[#allocation3 + $0x7] sm:$0x1]
    %v756 = vld [vmem:[#allocation3 + $0xf] sm:$0x1]
    %v759 = vrot.slane %v752, 7
    %v760 = vsel %vm231, %v759, %v751
    %v761 = vsel %vm132, %v760, 0
    %763 = vmatprep.subr.mxu0 0.0
    %764 = vmatpush1.msra.mxu0 %v135
    %765 = vmatprep.subr.mxu0 0.0
    %766 = vmatpush1.msra.mxu0 %v136
    %767 = vmatprep.subr.mxu0 0.0
    %768 = vmatpush1.msra.mxu0 %v137
    %769 = vmatprep.subr.mxu0 0.0
    %770 = vmatpush1.msra.mxu0 %v138
    %771 = vmatprep.subr.mxu0 0.0
    %772 = vmatpush1.msra.mxu0 0.0
    %773 = vmatprep.subr.mxu0 0.0
    %774 = vmatpush1.msra.mxu0 0.0
    %775 = vmatprep.subr.mxu0 0.0
    %776 = vmatpush1.msra.mxu0 0.0
    %777 = vmatprep.subr.mxu0 0.0
    %778 = vmatpush1.msra.mxu0 0.0
    %779 = vmatprep.subr.mxu0 0.0
    %780 = vmatpush1.msra.mxu0 0.0
    %781 = vmatprep.subr.mxu0 0.0
    %782 = vmatpush1.msra.mxu0 0.0
    %783 = vmatprep.subr.mxu0 0.0
    %784 = vmatpush1.msra.mxu0 0.0
    %785 = vmatprep.subr.mxu0 0.0
    %786 = vmatpush1.msra.mxu0 0.0
    %787 = vmatprep.subr.mxu0 0.0
    %788 = vmatpush1.msra.mxu0 0.0
    %789 = vmatprep.subr.mxu0 0.0
    %790 = vmatpush1.msra.mxu0 0.0
    %791 = vmatprep.subr.mxu0 0.0
    %792 = vmatpush1.msra.mxu0 0.0
    %793 = vmatprep.subr.mxu0 0.0
    %794 = vmatpush1.msra.mxu0 0.0
    %795 = vmatprep.subr.mxu0 0.0
    %796 = vmatpush1.msra.mxu0 0.0
    %797 = vmatprep.subr.mxu0 0.0
    %798 = vmatpush1.msra.mxu0 0.0
    %799 = vmatprep.subr.mxu0 0.0
    %800 = vmatpush1.msra.mxu0 0.0
    %801 = vmatprep.subr.mxu0 0.0
    %802 = vmatpush1.msra.mxu0 0.0
    %803 = vmatprep.subr.mxu0 0.0
    %804 = vmatpush1.msra.mxu0 0.0
    %805 = vmatprep.subr.mxu0 0.0
    %806 = vmatpush1.msra.mxu0 0.0
    %807 = vmatprep.subr.mxu0 0.0
    %808 = vmatpush1.msra.mxu0 0.0
    %809 = vmatprep.subr.mxu0 0.0
    %810 = vmatpush1.msra.mxu0 0.0
    %811 = vmatprep.subr.mxu0 0.0
    %812 = vmatpush1.msra.mxu0 0.0
    %813 = vmatprep.subr.mxu0 0.0
    %814 = vmatpush1.msra.mxu0 0.0
    %815 = vmatprep.subr.mxu0 0.0
    %816 = vmatpush1.msra.mxu0 0.0
    %817 = vmatprep.subr.mxu0 0.0
    %818 = vmatpush1.msra.mxu0 0.0
    %819 = vmatprep.subr.mxu0 0.0
    %820 = vmatpush1.msra.mxu0 0.0
    %821 = vmatprep.subr.mxu0 0.0
    %822 = vmatpush1.msra.mxu0 0.0
    %823 = vmatprep.subr.mxu0 0.0
    %824 = vmatpush1.msra.mxu0 0.0
    %825 = vmatprep.subr.mxu0 0.0
    %826 = vmatpush1.msra.mxu0 0.0
    %827 = vmatprep.mubr.f32.mxu0 0.0
    %828 = vmatmul.mubr.f32.gmra.mrb[0].mxu0 %v761
    %v829 = vpop.f32.mrb[0].mxu0
    %v830 = vadd.f32 0.0, %v829
    %v831 = vpop.f32.mrb[0].mxu0
    %832 = vdwg.mxu0
    %v834 = vrot.slane %v830, 1
    %v837 = vadd.f32 %v755, %v830
    %v838 = vadd.f32 %v756, %v834
    %v839 = vtanh.pop %v837
    %v840 = vtanh.pop %v838
    %841 = vst.msk [vmem:[#allocation4 + $0x7] sm:$0x1] %vm223, %v839
    %842 = vst.msk [vmem:[#allocation4 + $0xf] sm:$0x1] %vm223, %v840
    %v845 = vrot.slane %v840, 7
    %v846 = vsel %vm231, %v845, %v839
    %vm848 = vcmask 254976
    %849 = vst.msk [vmem:[#allocation2] sm:$0x3] %vm848, %v846
    %v850 = vld [vmem:[#allocation4] sm:$0xff]
    %v851 = vld [vmem:[#allocation4 + $0x8] sm:$0xff]
    %v852 = vld [vmem:[%s5] sm:$0xff]
    %v853 = vld [vmem:[%s5 + $0x8] sm:$0xff]
    %v854 = vld [vmem:[%s5 + $0x10] sm:$0xff]
    %v855 = vld [vmem:[%s5 + $0x18] sm:$0xff]
    %v856 = vld [vmem:[%s6] sm:$0x1]
    %v858 = vlaneseq
    %v859 = vshrl.u32 %v858, 7
    %v860 = vsub.s32 0, %v859
    %v861 = vrot.slane %v856, %v860
    %v864 = vsel %vm132, %v850, 0
    %v867 = vsel %vm132, %v851, 0
    %869 = vmatprep.subr.mxu0 0.0
    %870 = vmatpush1.msra.mxu0 %v852
    %871 = vmatprep.subr.mxu0 0.0
    %872 = vmatpush1.msra.mxu0 %v853
    %873 = vmatprep.subr.mxu0 0.0
    %874 = vmatpush1.msra.mxu0 %v854
    %875 = vmatprep.subr.mxu0 0.0
    %876 = vmatpush1.msra.mxu0 %v855
    %877 = vmatprep.subr.mxu0 0.0
    %878 = vmatpush1.msra.mxu0 0.0
    %879 = vmatprep.subr.mxu0 0.0
    %880 = vmatpush1.msra.mxu0 0.0
    %881 = vmatprep.subr.mxu0 0.0
    %882 = vmatpush1.msra.mxu0 0.0
    %883 = vmatprep.subr.mxu0 0.0
    %884 = vmatpush1.msra.mxu0 0.0
    %885 = vmatprep.subr.mxu0 0.0
    %886 = vmatpush1.msra.mxu0 0.0
    %887 = vmatprep.subr.mxu0 0.0
    %888 = vmatpush1.msra.mxu0 0.0
    %889 = vmatprep.subr.mxu0 0.0
    %890 = vmatpush1.msra.mxu0 0.0
    %891 = vmatprep.subr.mxu0 0.0
    %892 = vmatpush1.msra.mxu0 0.0
    %893 = vmatprep.subr.mxu0 0.0
    %894 = vmatpush1.msra.mxu0 0.0
    %895 = vmatprep.subr.mxu0 0.0
    %896 = vmatpush1.msra.mxu0 0.0
    %897 = vmatprep.subr.mxu0 0.0
    %898 = vmatpush1.msra.mxu0 0.0
    %899 = vmatprep.subr.mxu0 0.0
    %900 = vmatpush1.msra.mxu0 0.0
    %901 = vmatprep.subr.mxu0 0.0
    %902 = vmatpush1.msra.mxu0 0.0
    %903 = vmatprep.subr.mxu0 0.0
    %904 = vmatpush1.msra.mxu0 0.0
    %905 = vmatprep.subr.mxu0 0.0
    %906 = vmatpush1.msra.mxu0 0.0
    %907 = vmatprep.subr.mxu0 0.0
    %908 = vmatpush1.msra.mxu0 0.0
    %909 = vmatprep.subr.mxu0 0.0
    %910 = vmatpush1.msra.mxu0 0.0
    %911 = vmatprep.subr.mxu0 0.0
    %912 = vmatpush1.msra.mxu0 0.0
    %913 = vmatprep.subr.mxu0 0.0
    %914 = vmatpush1.msra.mxu0 0.0
    %915 = vmatprep.subr.mxu0 0.0
    %916 = vmatpush1.msra.mxu0 0.0
    %917 = vmatprep.subr.mxu0 0.0
    %918 = vmatpush1.msra.mxu0 0.0
    %919 = vmatprep.subr.mxu0 0.0
    %920 = vmatpush1.msra.mxu0 0.0
    %921 = vmatprep.subr.mxu0 0.0
    %922 = vmatpush1.msra.mxu0 0.0
    %923 = vmatprep.subr.mxu0 0.0
    %924 = vmatpush1.msra.mxu0 0.0
    %925 = vmatprep.subr.mxu0 0.0
    %926 = vmatpush1.msra.mxu0 0.0
    %927 = vmatprep.subr.mxu0 0.0
    %928 = vmatpush1.msra.mxu0 0.0
    %929 = vmatprep.subr.mxu0 0.0
    %930 = vmatpush1.msra.mxu0 0.0
    %931 = vmatprep.subr.mxu0 0.0
    %932 = vmatpush1.msra.mxu0 0.0
    %933 = vmatprep.mubr.f32.mxu0 0.0
    %934 = vmatmul.mubr.f32.gmra.mrb[0].mxu0 %v864
    %v935 = vpop.f32.mrb[0].mxu0
    %v936 = vadd.f32 %v861, %v935
    %v937 = vpop.f32.mrb[0].mxu0
    %938 = vmatprep.mubr.f32.mxu0 0.0
    %939 = vmatmul.mubr.f32.gmra.mrb[0].mxu0 %v867
    %v940 = vpop.f32.mrb[0].mxu0
    %v941 = vadd.f32 %v861, %v940
    %v942 = vpop.f32.mrb[0].mxu0
    %943 = vdwg.mxu0
    %944 = vst.msk [vmem:[%s7] sm:$0xff] %vm46, %v936
    %945 = vst.msk [vmem:[%s7 + $0x8] sm:$0xff] %vm46, %v941
    // Predicated region
    $region34: #{_rnn_forward_impl.1} parent=1 // pred_check
      _
    $region35: #{_rnn_forward_impl.1} parent=1 // pred_check_branch
      %947 = sbr.rel (0) target = $region37
    $region36: #{_rnn_forward_impl.1} parent=1 // pred_region
      _
    $region37: #{_rnn_forward_impl.1} parent=1 // pred_fallthru
      _
    // Predicated region
    $region38: #{_rnn_forward_impl.1} parent=1 // pred_check
      _
    $region39: #{_rnn_forward_impl.1} parent=1 // pred_check_branch
      %949 = sbr.rel (0) target = $region41
    $region40: #{_rnn_forward_impl.1} parent=1 // pred_region
      %s951 = ssub.s32 256, 256
      %952 = vsyncadd [#allocation5], %s951
      %s953 = sshll.u32 [#allocation4], 4
      %s954 = int_to_ptr.vmem [resolvable:$true] %s953
      %959 = dma.vmem_to_hbm [thread:$0]  %s954, 256, %s8, [#allocation5], 128, 128, 8
    $region41: #{_rnn_forward_impl.1} parent=1 // pred_fallthru
      _
    // Predicated region
    $region42: #{_rnn_forward_impl.1} parent=1 // pred_check
      _
    $region43: #{_rnn_forward_impl.1} parent=1 // pred_check_branch
      %961 = sbr.rel (0) target = $region45
    $region44: #{_rnn_forward_impl.1} parent=1 // pred_region
      _
    $region45: #{_rnn_forward_impl.1} parent=1 // pred_fallthru
      _
    // Predicated region
    $region46: #{_rnn_forward_impl.1} parent=1 // pred_check
      _
    $region47: #{_rnn_forward_impl.1} parent=1 // pred_check_branch
      %963 = sbr.rel (0) target = $region49
    $region48: #{_rnn_forward_impl.1} parent=1 // pred_region
      %964 = dma.done [#allocation5], 256
    $region49: #{_rnn_forward_impl.1} parent=1 // pred_fallthru
      _
    %965 = vsyncpa [#allocation5], 1

// kernel: _rnn_forward_impl.1
$region0: #{_rnn_forward_impl.1}
  #allocation0 [shape = 'u32[]', space=smem, size = 0x4, offset = 0x4, fixed_abs, tag = 'smem constant byte address 0x4 - core index']
  #allocation1 [shape = 'u32[144,128]{1,0:T(1,128)}', space=vmem, size = 0x12000, scoped, tag = 'internal scratch']
  #allocation2 [shape = 'f32[2,32]{1,0:T(2,128)}', space=vmem, size = 0x400, scoped, tag = 'scratch operand']
  #allocation3 [shape = 'f32[2,8,32]{2,1,0:T(8,128)}', space=vmem, size = 0x2000, scoped, tag = 'scratch operand']
  %s0 = inlined_call_operand.vmem [shape: f32[2,8,4], index: 0, kind: input, shape index: {}]
  %s1 = inlined_call_operand.vmem [shape: f32[2,32], index: 1, kind: input, shape index: {}]
  %s2 = inlined_call_operand.vmem [shape: f32[4,32], index: 2, kind: input, shape index: {}]
  %s3 = inlined_call_operand.vmem [shape: f32[32,32], index: 3, kind: input, shape index: {}]
  %s4 = inlined_call_operand.vmem [shape: f32[1,32], index: 4, kind: input, shape index: {}]
  %s5 = inlined_call_operand.vmem [shape: f32[32,4], index: 5, kind: input, shape index: {}]
  %s6 = inlined_call_operand.vmem [shape: f32[1,4], index: 6, kind: input, shape index: {}]
  %s7 = inlined_call_operand.vmem [shape: f32[2,8,4], index: 7, kind: output, shape index: {0}]
  %s8 = inlined_call_operand.hbm [shape: f32[2,8,32], index: 8, kind: output, shape index: {1}]
  %9 = xla_tuple %s7, %s8
  %s10 = sld [smem:[#allocation0]]
  $region50: #{_rnn_forward_impl.1} parent=0
    _
  %s12 = ssub.s32 1, %s10
  %s13 = scalar_select 0, %s12, %s10
  $region1: #{_rnn_forward_impl.1} parent=0
    #allocation4 [shape = 'u8[8192]{0}', space=vmem, size = 0x2000, scoped, tag = 'output window, operand 1, single buffered']
    #allocation5 [shape = 's32[1]{0}', space=sflag, size = 0x4, scoped, tag = 'scoped memory for _rnn_forward_impl.1']
    %14 = vsyncpa [#allocation5], 0
    // Predicated region
    $region2: #{_rnn_forward_impl.1} parent=1 // pred_check
      _
    $region3: #{_rnn_forward_impl.1} parent=1 // pred_check_branch
      %16 = sbr.rel (0) target = $region5
    $region4: #{_rnn_forward_impl.1} parent=1 // pred_region
      _
    $region5: #{_rnn_forward_impl.1} parent=1 // pred_fallthru
      _
    // Predicated region
    $region6: #{_rnn_forward_impl.1} parent=1 // pred_check
      _
    $region7: #{_rnn_forward_impl.1} parent=1 // pred_check_branch
      %18 = sbr.rel (0) target = $region9
    $region8: #{_rnn_forward_impl.1} parent=1 // pred_region
      _
    $region9: #{_rnn_forward_impl.1} parent=1 // pred_fallthru
      _
    // Predicated region
    $region10: #{_rnn_forward_impl.1} parent=1 // pred_check
      _
    $region11: #{_rnn_forward_impl.1} parent=1 // pred_check_branch
      %20 = sbr.rel (0) target = $region13
    $region12: #{_rnn_forward_impl.1} parent=1 // pred_region
      _
    $region13: #{_rnn_forward_impl.1} parent=1 // pred_fallthru
      _
    // Predicated region
    $region14: #{_rnn_forward_impl.1} parent=1 // pred_check
      _
    $region15: #{_rnn_forward_impl.1} parent=1 // pred_check_branch
      %22 = sbr.rel (0) target = $region17
    $region16: #{_rnn_forward_impl.1} parent=1 // pred_region
      _
    $region17: #{_rnn_forward_impl.1} parent=1 // pred_fallthru
      _
    // Predicated region
    $region18: #{_rnn_forward_impl.1} parent=1 // pred_check
      _
    $region19: #{_rnn_forward_impl.1} parent=1 // pred_check_branch
      %24 = sbr.rel (0) target = $region21
    $region20: #{_rnn_forward_impl.1} parent=1 // pred_region
      _
    $region21: #{_rnn_forward_impl.1} parent=1 // pred_fallthru
      _
    // Predicated region
    $region22: #{_rnn_forward_impl.1} parent=1 // pred_check
      _
    $region23: #{_rnn_forward_impl.1} parent=1 // pred_check_branch
      %26 = sbr.rel (0) target = $region25
    $region24: #{_rnn_forward_impl.1} parent=1 // pred_region
      _
    $region25: #{_rnn_forward_impl.1} parent=1 // pred_fallthru
      _
    // Predicated region
    $region26: #{_rnn_forward_impl.1} parent=1 // pred_check
      _
    $region27: #{_rnn_forward_impl.1} parent=1 // pred_check_branch
      %28 = sbr.rel (0) target = $region29
    $region28: #{_rnn_forward_impl.1} parent=1 // pred_region
      _
    $region29: #{_rnn_forward_impl.1} parent=1 // pred_fallthru
      _
    %p29 = scmp.eq.s32.totalorder 0, 0
    // Predicated region
    $region30: #{_rnn_forward_impl.1} parent=1 // pred_check
      %p30 = pneg %p29
    $region31: #{_rnn_forward_impl.1} parent=1 // pred_check_branch
      %32 = sbr.rel (%p30) target = $region33
    $region32: #{_rnn_forward_impl.1} parent=1 // pred_region
      %v33 = vld [vmem:[%s1] sm:$0x3]
      %vm34 = vcmask 254976
      %35 = vst.msk [vmem:[#allocation2] sm:$0x3] %vm34, %v33
    $region33: #{_rnn_forward_impl.1} parent=1 // pred_fallthru
      _
    %v36 = vld [vmem:[%s0] sm:$0xff]
    %v37 = vld [vmem:[%s0 + $0x8] sm:$0xff]
    %v38 = vld [vmem:[%s2] sm:$0xf]
    %v39 = vld [vmem:[%s4] sm:$0x1]
    %v41 = vlaneseq
    %v42 = vshrl.u32 %v41, 7
    %v43 = vsub.s32 0, %v42
    %v44 = vrot.slane %v39, %v43
    %vm46 = vcmask 31744
    %v48 = vsel %vm46, %v36, 0
    %v51 = vsel %vm46, %v37, 0
    %vm53 = vcmask 1043456
    %v55 = vsel %vm53, %v38, 0
    %57 = vmatprep.subr.mxu0 0.0
    %58 = vmatpush1.msra.mxu0 %v55
    %59 = vmatprep.subr.mxu0 0.0
    %60 = vmatpush1.msra.mxu0 0.0
    %61 = vmatprep.subr.mxu0 0.0
    %62 = vmatpush1.msra.mxu0 0.0
    %63 = vmatprep.subr.mxu0 0.0
    %64 = vmatpush1.msra.mxu0 0.0
    %65 = vmatprep.subr.mxu0 0.0
    %66 = vmatpush1.msra.mxu0 0.0
    %67 = vmatprep.subr.mxu0 0.0
    %68 = vmatpush1.msra.mxu0 0.0
    %69 = vmatprep.subr.mxu0 0.0
    %70 = vmatpush1.msra.mxu0 0.0
    %71 = vmatprep.subr.mxu0 0.0
    %72 = vmatpush1.msra.mxu0 0.0
    %73 = vmatprep.subr.mxu0 0.0
    %74 = vmatpush1.msra.mxu0 0.0
    %75 = vmatprep.subr.mxu0 0.0
    %76 = vmatpush1.msra.mxu0 0.0
    %77 = vmatprep.subr.mxu0 0.0
    %78 = vmatpush1.msra.mxu0 0.0
    %79 = vmatprep.subr.mxu0 0.0
    %80 = vmatpush1.msra.mxu0 0.0
    %81 = vmatprep.subr.mxu0 0.0
    %82 = vmatpush1.msra.mxu0 0.0
    %83 = vmatprep.subr.mxu0 0.0
    %84 = vmatpush1.msra.mxu0 0.0
    %85 = vmatprep.subr.mxu0 0.0
    %86 = vmatpush1.msra.mxu0 0.0
    %87 = vmatprep.subr.mxu0 0.0
    %88 = vmatpush1.msra.mxu0 0.0
    %89 = vmatprep.subr.mxu0 0.0
    %90 = vmatpush1.msra.mxu0 0.0
    %91 = vmatprep.subr.mxu0 0.0
    %92 = vmatpush1.msra.mxu0 0.0
    %93 = vmatprep.subr.mxu0 0.0
    %94 = vmatpush1.msra.mxu0 0.0
    %95 = vmatprep.subr.mxu0 0.0
    %96 = vmatpush1.msra.mxu0 0.0
    %97 = vmatprep.subr.mxu0 0.0
    %98 = vmatpush1.msra.mxu0 0.0
    %99 = vmatprep.subr.mxu0 0.0
    %100 = vmatpush1.msra.mxu0 0.0
    %101 = vmatprep.subr.mxu0 0.0
    %102 = vmatpush1.msra.mxu0 0.0
    %103 = vmatprep.subr.mxu0 0.0
    %104 = vmatpush1.msra.mxu0 0.0
    %105 = vmatprep.subr.mxu0 0.0
    %106 = vmatpush1.msra.mxu0 0.0
    %107 = vmatprep.subr.mxu0 0.0
    %108 = vmatpush1.msra.mxu0 0.0
    %109 = vmatprep.subr.mxu0 0.0
    %110 = vmatpush1.msra.mxu0 0.0
    %111 = vmatprep.subr.mxu0 0.0
    %112 = vmatpush1.msra.mxu0 0.0
    %113 = vmatprep.subr.mxu0 0.0
    %114 = vmatpush1.msra.mxu0 0.0
    %115 = vmatprep.subr.mxu0 0.0
    %116 = vmatpush1.msra.mxu0 0.0
    %117 = vmatprep.subr.mxu0 0.0
    %118 = vmatpush1.msra.mxu0 0.0
    %119 = vmatprep.subr.mxu0 0.0
    %120 = vmatpush1.msra.mxu0 0.0
    %121 = vmatprep.mubr.f32.mxu0 0.0
    %122 = vmatmul.mubr.f32.gmra.mrb[0].mxu0 %v48
    %v123 = vpop.f32.mrb[0].mxu0
    %v124 = vadd.f32 %v44, %v123
    %v125 = vpop.f32.mrb[0].mxu0
    %126 = vmatprep.mubr.f32.mxu0 0.0
    %127 = vmatmul.mubr.f32.gmra.mrb[0].mxu0 %v51
    %v128 = vpop.f32.mrb[0].mxu0
    %v129 = vadd.f32 %v44, %v128
    %v130 = vpop.f32.mrb[0].mxu0
    %131 = vdwg.mxu0
    %vm132 = vcmask 261120
    %133 = vst.msk [vmem:[#allocation3] sm:$0xff] %vm132, %v124
    %134 = vst.msk [vmem:[#allocation3 + $0x8] sm:$0xff] %vm132, %v129
    %v135 = vld [vmem:[%s3] sm:$0xff]
    %v136 = vld [vmem:[%s3 + $0x8] sm:$0xff]
    %v137 = vld [vmem:[%s3 + $0x10] sm:$0xff]
    %v138 = vld [vmem:[%s3 + $0x18] sm:$0xff]
    %v139 = vld [vmem:[#allocation2] sm:$0x3]
    %v140 = vld [vmem:[#allocation3] sm:$0x1]
    %v141 = vld [vmem:[#allocation3 + $0x8] sm:$0x1]
    %v143 = vsel %vm132, %v139, 0
    %145 = vmatprep.subr.mxu0 0.0
    %146 = vmatpush1.msra.mxu0 %v135
    %147 = vmatprep.subr.mxu0 0.0
    %148 = vmatpush1.msra.mxu0 %v136
    %149 = vmatprep.subr.mxu0 0.0
    %150 = vmatpush1.msra.mxu0 %v137
    %151 = vmatprep.subr.mxu0 0.0
    %152 = vmatpush1.msra.mxu0 %v138
    %153 = vmatprep.subr.mxu0 0.0
    %154 = vmatpush1.msra.mxu0 0.0
    %155 = vmatprep.subr.mxu0 0.0
    %156 = vmatpush1.msra.mxu0 0.0
    %157 = vmatprep.subr.mxu0 0.0
    %158 = vmatpush1.msra.mxu0 0.0
    %159 = vmatprep.subr.mxu0 0.0
    %160 = vmatpush1.msra.mxu0 0.0
    %161 = vmatprep.subr.mxu0 0.0
    %162 = vmatpush1.msra.mxu0 0.0
    %163 = vmatprep.subr.mxu0 0.0
    %164 = vmatpush1.msra.mxu0 0.0
    %165 = vmatprep.subr.mxu0 0.0
    %166 = vmatpush1.msra.mxu0 0.0
    %167 = vmatprep.subr.mxu0 0.0
    %168 = vmatpush1.msra.mxu0 0.0
    %169 = vmatprep.subr.mxu0 0.0
    %170 = vmatpush1.msra.mxu0 0.0
    %171 = vmatprep.subr.mxu0 0.0
    %172 = vmatpush1.msra.mxu0 0.0
    %173 = vmatprep.subr.mxu0 0.0
    %174 = vmatpush1.msra.mxu0 0.0
    %175 = vmatprep.subr.mxu0 0.0
    %176 = vmatpush1.msra.mxu0 0.0
    %177 = vmatprep.subr.mxu0 0.0
    %178 = vmatpush1.msra.mxu0 0.0
    %179 = vmatprep.subr.mxu0 0.0
    %180 = vmatpush1.msra.mxu0 0.0
    %181 = vmatprep.subr.mxu0 0.0
    %182 = vmatpush1.msra.mxu0 0.0
    %183 = vmatprep.subr.mxu0 0.0
    %184 = vmatpush1.msra.mxu0 0.0
    %185 = vmatprep.subr.mxu0 0.0
    %186 = vmatpush1.msra.mxu0 0.0
    %187 = vmatprep.subr.mxu0 0.0
    %188 = vmatpush1.msra.mxu0 0.0
    %189 = vmatprep.subr.mxu0 0.0
    %190 = vmatpush1.msra.mxu0 0.0
    %191 = vmatprep.subr.mxu0 0.0
    %192 = vmatpush1.msra.mxu0 0.0
    %193 = vmatprep.subr.mxu0 0.0
    %194 = vmatpush1.msra.mxu0 0.0
    %195 = vmatprep.subr.mxu0 0.0
    %196 = vmatpush1.msra.mxu0 0.0
    %197 = vmatprep.subr.mxu0 0.0
    %198 = vmatpush1.msra.mxu0 0.0
    %199 = vmatprep.subr.mxu0 0.0
    %200 = vmatpush1.msra.mxu0 0.0
    %201 = vmatprep.subr.mxu0 0.0
    %202 = vmatpush1.msra.mxu0 0.0
    %203 = vmatprep.subr.mxu0 0.0
    %204 = vmatpush1.msra.mxu0 0.0
    %205 = vmatprep.subr.mxu0 0.0
    %206 = vmatpush1.msra.mxu0 0.0
    %207 = vmatprep.subr.mxu0 0.0
    %208 = vmatpush1.msra.mxu0 0.0
    %209 = vmatprep.mubr.f32.mxu0 0.0
    %210 = vmatmul.mubr.f32.gmra.mrb[0].mxu0 %v143
    %v211 = vpop.f32.mrb[0].mxu0
    %v212 = vadd.f32 0.0, %v211
    %v213 = vpop.f32.mrb[0].mxu0
    %214 = vdwg.mxu0
    %v216 = vrot.slane %v212, 1
    %v219 = vadd.f32 %v140, %v212
    %v220 = vadd.f32 %v141, %v216
    %v221 = vtanh.pop %v219
    %v222 = vtanh.pop %v220
    %vm223 = vcmask 253952
    %224 = vst.msk [vmem:[#allocation4] sm:$0x1] %vm223, %v221
    %225 = vst.msk [vmem:[#allocation4 + $0x8] sm:$0x1] %vm223, %v222
    %v226 = vld [vmem:[#allocation3 + $0x1] sm:$0x1]
    %v227 = vld [vmem:[#allocation3 + $0x9] sm:$0x1]
    %v230 = vrot.slane %v222, 7
    %vm231 = vcmask 1041409
    %v232 = vsel %vm231, %v230, %v221
    %v233 = vsel %vm132, %v232, 0
    %235 = vmatprep.subr.mxu0 0.0
    %236 = vmatpush1.msra.mxu0 %v135
    %237 = vmatprep.subr.mxu0 0.0
    %238 = vmatpush1.msra.mxu0 %v136
    %239 = vmatprep.subr.mxu0 0.0
    %240 = vmatpush1.msra.mxu0 %v137
    %241 = vmatprep.subr.mxu0 0.0
    %242 = vmatpush1.msra.mxu0 %v138
    %243 = vmatprep.subr.mxu0 0.0
    %244 = vmatpush1.msra.mxu0 0.0
    %245 = vmatprep.subr.mxu0 0.0
    %246 = vmatpush1.msra.mxu0 0.0
    %247 = vmatprep.subr.mxu0 0.0
    %248 = vmatpush1.msra.mxu0 0.0
    %249 = vmatprep.subr.mxu0 0.0
    %250 = vmatpush1.msra.mxu0 0.0
    %251 = vmatprep.subr.mxu0 0.0
    %252 = vmatpush1.msra.mxu0 0.0
    %253 = vmatprep.subr.mxu0 0.0
    %254 = vmatpush1.msra.mxu0 0.0
    %255 = vmatprep.subr.mxu0 0.0
    %256 = vmatpush1.msra.mxu0 0.0
    %257 = vmatprep.subr.mxu0 0.0
    %258 = vmatpush1.msra.mxu0 0.0
    %259 = vmatprep.subr.mxu0 0.0
    %260 = vmatpush1.msra.mxu0 0.0
    %261 = vmatprep.subr.mxu0 0.0
    %262 = vmatpush1.msra.mxu0 0.0
    %263 = vmatprep.subr.mxu0 0.0
    %264 = vmatpush1.msra.mxu0 0.0
    %265 = vmatprep.subr.mxu0 0.0
    %266 = vmatpush1.msra.mxu0 0.0
    %267 = vmatprep.subr.mxu0 0.0
    %268 = vmatpush1.msra.mxu0 0.0
    %269 = vmatprep.subr.mxu0 0.0
    %270 = vmatpush1.msra.mxu0 0.0
    %271 = vmatprep.subr.mxu0 0.0
    %272 = vmatpush1.msra.mxu0 0.0
    %273 = vmatprep.subr.mxu0 0.0
    %274 = vmatpush1.msra.mxu0 0.0
    %275 = vmatprep.subr.mxu0 0.0
    %276 = vmatpush1.msra.mxu0 0.0
    %277 = vmatprep.subr.mxu0 0.0
    %278 = vmatpush1.msra.mxu0 0.0
    %279 = vmatprep.subr.mxu0 0.0
    %280 = vmatpush1.msra.mxu0 0.0
    %281 = vmatprep.subr.mxu0 0.0
    %282 = vmatpush1.msra.mxu0 0.0
    %283 = vmatprep.subr.mxu0 0.0
    %284 = vmatpush1.msra.mxu0 0.0
    %285 = vmatprep.subr.mxu0 0.0
    %286 = vmatpush1.msra.mxu0 0.0
    %287 = vmatprep.subr.mxu0 0.0
    %288 = vmatpush1.msra.mxu0 0.0
    %289 = vmatprep.subr.mxu0 0.0
    %290 = vmatpush1.msra.mxu0 0.0
    %291 = vmatprep.subr.mxu0 0.0
    %292 = vmatpush1.msra.mxu0 0.0
    %293 = vmatprep.subr.mxu0 0.0
    %294 = vmatpush1.msra.mxu0 0.0
    %295 = vmatprep.subr.mxu0 0.0
    %296 = vmatpush1.msra.mxu0 0.0
    %297 = vmatprep.subr.mxu0 0.0
    %298 = vmatpush1.msra.mxu0 0.0
    %299 = vmatprep.mubr.f32.mxu0 0.0
    %300 = vmatmul.mubr.f32.gmra.mrb[0].mxu0 %v233
    %v301 = vpop.f32.mrb[0].mxu0
    %v302 = vadd.f32 0.0, %v301
    %v303 = vpop.f32.mrb[0].mxu0
    %304 = vdwg.mxu0
    %v306 = vrot.slane %v302, 1
    %v309 = vadd.f32 %v226, %v302
    %v310 = vadd.f32 %v227, %v306
    %v311 = vtanh.pop %v309
    %v312 = vtanh.pop %v310
    %313 = vst.msk [vmem:[#allocation4 + $0x1] sm:$0x1] %vm223, %v311
    %314 = vst.msk [vmem:[#allocation4 + $0x9] sm:$0x1] %vm223, %v312
    %v315 = vld [vmem:[#allocation3 + $0x2] sm:$0x1]
    %v316 = vld [vmem:[#allocation3 + $0xa] sm:$0x1]
    %v319 = vrot.slane %v312, 7
    %v320 = vsel %vm231, %v319, %v311
    %v321 = vsel %vm132, %v320, 0
    %323 = vmatprep.subr.mxu0 0.0
    %324 = vmatpush1.msra.mxu0 %v135
    %325 = vmatprep.subr.mxu0 0.0
    %326 = vmatpush1.msra.mxu0 %v136
    %327 = vmatprep.subr.mxu0 0.0
    %328 = vmatpush1.msra.mxu0 %v137
    %329 = vmatprep.subr.mxu0 0.0
    %330 = vmatpush1.msra.mxu0 %v138
    %331 = vmatprep.subr.mxu0 0.0
    %332 = vmatpush1.msra.mxu0 0.0
    %333 = vmatprep.subr.mxu0 0.0
    %334 = vmatpush1.msra.mxu0 0.0
    %335 = vmatprep.subr.mxu0 0.0
    %336 = vmatpush1.msra.mxu0 0.0
    %337 = vmatprep.subr.mxu0 0.0
    %338 = vmatpush1.msra.mxu0 0.0
    %339 = vmatprep.subr.mxu0 0.0
    %340 = vmatpush1.msra.mxu0 0.0
    %341 = vmatprep.subr.mxu0 0.0
    %342 = vmatpush1.msra.mxu0 0.0
    %343 = vmatprep.subr.mxu0 0.0
    %344 = vmatpush1.msra.mxu0 0.0
    %345 = vmatprep.subr.mxu0 0.0
    %346 = vmatpush1.msra.mxu0 0.0
    %347 = vmatprep.subr.mxu0 0.0
    %348 = vmatpush1.msra.mxu0 0.0
    %349 = vmatprep.subr.mxu0 0.0
    %350 = vmatpush1.msra.mxu0 0.0
    %351 = vmatprep.subr.mxu0 0.0
    %352 = vmatpush1.msra.mxu0 0.0
    %353 = vmatprep.subr.mxu0 0.0
    %354 = vmatpush1.msra.mxu0 0.0
    %355 = vmatprep.subr.mxu0 0.0
    %356 = vmatpush1.msra.mxu0 0.0
    %357 = vmatprep.subr.mxu0 0.0
    %358 = vmatpush1.msra.mxu0 0.0
    %359 = vmatprep.subr.mxu0 0.0
    %360 = vmatpush1.msra.mxu0 0.0
    %361 = vmatprep.subr.mxu0 0.0
    %362 = vmatpush1.msra.mxu0 0.0
    %363 = vmatprep.subr.mxu0 0.0
    %364 = vmatpush1.msra.mxu0 0.0
    %365 = vmatprep.subr.mxu0 0.0
    %366 = vmatpush1.msra.mxu0 0.0
    %367 = vmatprep.subr.mxu0 0.0
    %368 = vmatpush1.msra.mxu0 0.0
    %369 = vmatprep.subr.mxu0 0.0
    %370 = vmatpush1.msra.mxu0 0.0
    %371 = vmatprep.subr.mxu0 0.0
    %372 = vmatpush1.msra.mxu0 0.0
    %373 = vmatprep.subr.mxu0 0.0
    %374 = vmatpush1.msra.mxu0 0.0
    %375 = vmatprep.subr.mxu0 0.0
    %376 = vmatpush1.msra.mxu0 0.0
    %377 = vmatprep.subr.mxu0 0.0
    %378 = vmatpush1.msra.mxu0 0.0
    %379 = vmatprep.subr.mxu0 0.0
    %380 = vmatpush1.msra.mxu0 0.0
    %381 = vmatprep.subr.mxu0 0.0
    %382 = vmatpush1.msra.mxu0 0.0
    %383 = vmatprep.subr.mxu0 0.0
    %384 = vmatpush1.msra.mxu0 0.0
    %385 = vmatprep.subr.mxu0 0.0
    %386 = vmatpush1.msra.mxu0 0.0
    %387 = vmatprep.mubr.f32.mxu0 0.0
    %388 = vmatmul.mubr.f32.gmra.mrb[0].mxu0 %v321
    %v389 = vpop.f32.mrb[0].mxu0
    %v390 = vadd.f32 0.0, %v389
    %v391 = vpop.f32.mrb[0].mxu0
    %392 = vdwg.mxu0
    %v394 = vrot.slane %v390, 1
    %v397 = vadd.f32 %v315, %v390
    %v398 = vadd.f32 %v316, %v394
    %v399 = vtanh.pop %v397
    %v400 = vtanh.pop %v398
    %401 = vst.msk [vmem:[#allocation4 + $0x2] sm:$0x1] %vm223, %v399
    %402 = vst.msk [vmem:[#allocation4 + $0xa] sm:$0x1] %vm223, %v400
    %v403 = vld [vmem:[#allocation3 + $0x3] sm:$0x1]
    %v404 = vld [vmem:[#allocation3 + $0xb] sm:$0x1]
    %v407 = vrot.slane %v400, 7
    %v408 = vsel %vm231, %v407, %v399
    %v409 = vsel %vm132, %v408, 0
    %411 = vmatprep.subr.mxu0 0.0
    %412 = vmatpush1.msra.mxu0 %v135
    %413 = vmatprep.subr.mxu0 0.0
    %414 = vmatpush1.msra.mxu0 %v136
    %415 = vmatprep.subr.mxu0 0.0
    %416 = vmatpush1.msra.mxu0 %v137
    %417 = vmatprep.subr.mxu0 0.0
    %418 = vmatpush1.msra.mxu0 %v138
    %419 = vmatprep.subr.mxu0 0.0
    %420 = vmatpush1.msra.mxu0 0.0
    %421 = vmatprep.subr.mxu0 0.0
    %422 = vmatpush1.msra.mxu0 0.0
    %423 = vmatprep.subr.mxu0 0.0
    %424 = vmatpush1.msra.mxu0 0.0
    %425 = vmatprep.subr.mxu0 0.0
    %426 = vmatpush1.msra.mxu0 0.0
    %427 = vmatprep.subr.mxu0 0.0
    %428 = vmatpush1.msra.mxu0 0.0
    %429 = vmatprep.subr.mxu0 0.0
    %430 = vmatpush1.msra.mxu0 0.0
    %431 = vmatprep.subr.mxu0 0.0
    %432 = vmatpush1.msra.mxu0 0.0
    %433 = vmatprep.subr.mxu0 0.0
    %434 = vmatpush1.msra.mxu0 0.0
    %435 = vmatprep.subr.mxu0 0.0
    %436 = vmatpush1.msra.mxu0 0.0
    %437 = vmatprep.subr.mxu0 0.0
    %438 = vmatpush1.msra.mxu0 0.0
    %439 = vmatprep.subr.mxu0 0.0
    %440 = vmatpush1.msra.mxu0 0.0
    %441 = vmatprep.subr.mxu0 0.0
    %442 = vmatpush1.msra.mxu0 0.0
    %443 = vmatprep.subr.mxu0 0.0
    %444 = vmatpush1.msra.mxu0 0.0
    %445 = vmatprep.subr.mxu0 0.0
    %446 = vmatpush1.msra.mxu0 0.0
    %447 = vmatprep.subr.mxu0 0.0
    %448 = vmatpush1.msra.mxu0 0.0
    %449 = vmatprep.subr.mxu0 0.0
    %450 = vmatpush1.msra.mxu0 0.0
    %451 = vmatprep.subr.mxu0 0.0
    %452 = vmatpush1.msra.mxu0 0.0
    %453 = vmatprep.subr.mxu0 0.0
    %454 = vmatpush1.msra.mxu0 0.0
    %455 = vmatprep.subr.mxu0 0.0
    %456 = vmatpush1.msra.mxu0 0.0
    %457 = vmatprep.subr.mxu0 0.0
    %458 = vmatpush1.msra.mxu0 0.0
    %459 = vmatprep.subr.mxu0 0.0
    %460 = vmatpush1.msra.mxu0 0.0
    %461 = vmatprep.subr.mxu0 0.0
    %462 = vmatpush1.msra.mxu0 0.0
    %463 = vmatprep.subr.mxu0 0.0
    %464 = vmatpush1.msra.mxu0 0.0
    %465 = vmatprep.subr.mxu0 0.0
    %466 = vmatpush1.msra.mxu0 0.0
    %467 = vmatprep.subr.mxu0 0.0
    %468 = vmatpush1.msra.mxu0 0.0
    %469 = vmatprep.subr.mxu0 0.0
    %470 = vmatpush1.msra.mxu0 0.0
    %471 = vmatprep.subr.mxu0 0.0
    %472 = vmatpush1.msra.mxu0 0.0
    %473 = vmatprep.subr.mxu0 0.0
    %474 = vmatpush1.msra.mxu0 0.0
    %475 = vmatprep.mubr.f32.mxu0 0.0
    %476 = vmatmul.mubr.f32.gmra.mrb[0].mxu0 %v409
    %v477 = vpop.f32.mrb[0].mxu0
    %v478 = vadd.f32 0.0, %v477
    %v479 = vpop.f32.mrb[0].mxu0
    %480 = vdwg.mxu0
    %v482 = vrot.slane %v478, 1
    %v485 = vadd.f32 %v403, %v478
    %v486 = vadd.f32 %v404, %v482
    %v487 = vtanh.pop %v485
    %v488 = vtanh.pop %v486
    %489 = vst.msk [vmem:[#allocation4 + $0x3] sm:$0x1] %vm223, %v487
    %490 = vst.msk [vmem:[#allocation4 + $0xb] sm:$0x1] %vm223, %v488
    %v491 = vld [vmem:[#allocation3 + $0x4] sm:$0x1]
    %v492 = vld [vmem:[#allocation3 + $0xc] sm:$0x1]
    %v495 = vrot.slane %v488, 7
    %v496 = vsel %vm231, %v495, %v487
    %v497 = vsel %vm132, %v496, 0
    %499 = vmatprep.subr.mxu0 0.0
    %500 = vmatpush1.msra.mxu0 %v135
    %501 = vmatprep.subr.mxu0 0.0
    %502 = vmatpush1.msra.mxu0 %v136
    %503 = vmatprep.subr.mxu0 0.0
    %504 = vmatpush1.msra.mxu0 %v137
    %505 = vmatprep.subr.mxu0 0.0
    %506 = vmatpush1.msra.mxu0 %v138
    %507 = vmatprep.subr.mxu0 0.0
    %508 = vmatpush1.msra.mxu0 0.0
    %509 = vmatprep.subr.mxu0 0.0
    %510 = vmatpush1.msra.mxu0 0.0
    %511 = vmatprep.subr.mxu0 0.0
    %512 = vmatpush1.msra.mxu0 0.0
    %513 = vmatprep.subr.mxu0 0.0
    %514 = vmatpush1.msra.mxu0 0.0
    %515 = vmatprep.subr.mxu0 0.0
    %516 = vmatpush1.msra.mxu0 0.0
    %517 = vmatprep.subr.mxu0 0.0
    %518 = vmatpush1.msra.mxu0 0.0
    %519 = vmatprep.subr.mxu0 0.0
    %520 = vmatpush1.msra.mxu0 0.0
    %521 = vmatprep.subr.mxu0 0.0
    %522 = vmatpush1.msra.mxu0 0.0
    %523 = vmatprep.subr.mxu0 0.0
    %524 = vmatpush1.msra.mxu0 0.0
    %525 = vmatprep.subr.mxu0 0.0
    %526 = vmatpush1.msra.mxu0 0.0
    %527 = vmatprep.subr.mxu0 0.0
    %528 = vmatpush1.msra.mxu0 0.0
    %529 = vmatprep.subr.mxu0 0.0
    %530 = vmatpush1.msra.mxu0 0.0
    %531 = vmatprep.subr.mxu0 0.0
    %532 = vmatpush1.msra.mxu0 0.0
    %533 = vmatprep.subr.mxu0 0.0
    %534 = vmatpush1.msra.mxu0 0.0
    %535 = vmatprep.subr.mxu0 0.0
    %536 = vmatpush1.msra.mxu0 0.0
    %537 = vmatprep.subr.mxu0 0.0
    %538 = vmatpush1.msra.mxu0 0.0
    %539 = vmatprep.subr.mxu0 0.0
    %540 = vmatpush1.msra.mxu0 0.0
    %541 = vmatprep.subr.mxu0 0.0
    %542 = vmatpush1.msra.mxu0 0.0
    %543 = vmatprep.subr.mxu0 0.0
    %544 = vmatpush1.msra.mxu0 0.0
    %545 = vmatprep.subr.mxu0 0.0
    %546 = vmatpush1.msra.mxu0 0.0
    %547 = vmatprep.subr.mxu0 0.0
    %548 = vmatpush1.msra.mxu0 0.0
    %549 = vmatprep.subr.mxu0 0.0
    %550 = vmatpush1.msra.mxu0 0.0
    %551 = vmatprep.subr.mxu0 0.0
    %552 = vmatpush1.msra.mxu0 0.0
    %553 = vmatprep.subr.mxu0 0.0
    %554 = vmatpush1.msra.mxu0 0.0
    %555 = vmatprep.subr.mxu0 0.0
    %556 = vmatpush1.msra.mxu0 0.0
    %557 = vmatprep.subr.mxu0 0.0
    %558 = vmatpush1.msra.mxu0 0.0
    %559 = vmatprep.subr.mxu0 0.0
    %560 = vmatpush1.msra.mxu0 0.0
    %561 = vmatprep.subr.mxu0 0.0
    %562 = vmatpush1.msra.mxu0 0.0
    %563 = vmatprep.mubr.f32.mxu0 0.0
    %564 = vmatmul.mubr.f32.gmra.mrb[0].mxu0 %v497
    %v565 = vpop.f32.mrb[0].mxu0
    %v566 = vadd.f32 0.0, %v565
    %v567 = vpop.f32.mrb[0].mxu0
    %568 = vdwg.mxu0
    %v570 = vrot.slane %v566, 1
    %v573 = vadd.f32 %v491, %v566
    %v574 = vadd.f32 %v492, %v570
    %v575 = vtanh.pop %v573
    %v576 = vtanh.pop %v574
    %577 = vst.msk [vmem:[#allocation4 + $0x4] sm:$0x1] %vm223, %v575
    %578 = vst.msk [vmem:[#allocation4 + $0xc] sm:$0x1] %vm223, %v576
    %v579 = vld [vmem:[#allocation3 + $0x5] sm:$0x1]
    %v580 = vld [vmem:[#allocation3 + $0xd] sm:$0x1]
    %v583 = vrot.slane %v576, 7
    %v584 = vsel %vm231, %v583, %v575
    %v585 = vsel %vm132, %v584, 0
    %587 = vmatprep.subr.mxu0 0.0
    %588 = vmatpush1.msra.mxu0 %v135
    %589 = vmatprep.subr.mxu0 0.0
    %590 = vmatpush1.msra.mxu0 %v136
    %591 = vmatprep.subr.mxu0 0.0
    %592 = vmatpush1.msra.mxu0 %v137
    %593 = vmatprep.subr.mxu0 0.0
    %594 = vmatpush1.msra.mxu0 %v138
    %595 = vmatprep.subr.mxu0 0.0
    %596 = vmatpush1.msra.mxu0 0.0
    %597 = vmatprep.subr.mxu0 0.0
    %598 = vmatpush1.msra.mxu0 0.0
    %599 = vmatprep.subr.mxu0 0.0
    %600 = vmatpush1.msra.mxu0 0.0
    %601 = vmatprep.subr.mxu0 0.0
    %602 = vmatpush1.msra.mxu0 0.0
    %603 = vmatprep.subr.mxu0 0.0
    %604 = vmatpush1.msra.mxu0 0.0
    %605 = vmatprep.subr.mxu0 0.0
    %606 = vmatpush1.msra.mxu0 0.0
    %607 = vmatprep.subr.mxu0 0.0
    %608 = vmatpush1.msra.mxu0 0.0
    %609 = vmatprep.subr.mxu0 0.0
    %610 = vmatpush1.msra.mxu0 0.0
    %611 = vmatprep.subr.mxu0 0.0
    %612 = vmatpush1.msra.mxu0 0.0
    %613 = vmatprep.subr.mxu0 0.0
    %614 = vmatpush1.msra.mxu0 0.0
    %615 = vmatprep.subr.mxu0 0.0
    %616 = vmatpush1.msra.mxu0 0.0
    %617 = vmatprep.subr.mxu0 0.0
    %618 = vmatpush1.msra.mxu0 0.0
    %619 = vmatprep.subr.mxu0 0.0
    %620 = vmatpush1.msra.mxu0 0.0
    %621 = vmatprep.subr.mxu0 0.0
    %622 = vmatpush1.msra.mxu0 0.0
    %623 = vmatprep.subr.mxu0 0.0
    %624 = vmatpush1.msra.mxu0 0.0
    %625 = vmatprep.subr.mxu0 0.0
    %626 = vmatpush1.msra.mxu0 0.0
    %627 = vmatprep.subr.mxu0 0.0
    %628 = vmatpush1.msra.mxu0 0.0
    %629 = vmatprep.subr.mxu0 0.0
    %630 = vmatpush1.msra.mxu0 0.0
    %631 = vmatprep.subr.mxu0 0.0
    %632 = vmatpush1.msra.mxu0 0.0
    %633 = vmatprep.subr.mxu0 0.0
    %634 = vmatpush1.msra.mxu0 0.0
    %635 = vmatprep.subr.mxu0 0.0
    %636 = vmatpush1.msra.mxu0 0.0
    %637 = vmatprep.subr.mxu0 0.0
    %638 = vmatpush1.msra.mxu0 0.0
    %639 = vmatprep.subr.mxu0 0.0
    %640 = vmatpush1.msra.mxu0 0.0
    %641 = vmatprep.subr.mxu0 0.0
    %642 = vmatpush1.msra.mxu0 0.0
    %643 = vmatprep.subr.mxu0 0.0
    %644 = vmatpush1.msra.mxu0 0.0
    %645 = vmatprep.subr.mxu0 0.0
    %646 = vmatpush1.msra.mxu0 0.0
    %647 = vmatprep.subr.mxu0 0.0
    %648 = vmatpush1.msra.mxu0 0.0
    %649 = vmatprep.subr.mxu0 0.0
    %650 = vmatpush1.msra.mxu0 0.0
    %651 = vmatprep.mubr.f32.mxu0 0.0
    %652 = vmatmul.mubr.f32.gmra.mrb[0].mxu0 %v585
    %v653 = vpop.f32.mrb[0].mxu0
    %v654 = vadd.f32 0.0, %v653
    %v655 = vpop.f32.mrb[0].mxu0
    %656 = vdwg.mxu0
    %v658 = vrot.slane %v654, 1
    %v661 = vadd.f32 %v579, %v654
    %v662 = vadd.f32 %v580, %v658
    %v663 = vtanh.pop %v661
    %v664 = vtanh.pop %v662
    %665 = vst.msk [vmem:[#allocation4 + $0x5] sm:$0x1] %vm223, %v663
    %666 = vst.msk [vmem:[#allocation4 + $0xd] sm:$0x1] %vm223, %v664
    %v667 = vld [vmem:[#allocation3 + $0x6] sm:$0x1]
    %v668 = vld [vmem:[#allocation3 + $0xe] sm:$0x1]
    %v671 = vrot.slane %v664, 7
    %v672 = vsel %vm231, %v671, %v663
    %v673 = vsel %vm132, %v672, 0
    %675 = vmatprep.subr.mxu0 0.0
    %676 = vmatpush1.msra.mxu0 %v135
    %677 = vmatprep.subr.mxu0 0.0
    %678 = vmatpush1.msra.mxu0 %v136
    %679 = vmatprep.subr.mxu0 0.0
    %680 = vmatpush1.msra.mxu0 %v137
    %681 = vmatprep.subr.mxu0 0.0
    %682 = vmatpush1.msra.mxu0 %v138
    %683 = vmatprep.subr.mxu0 0.0
    %684 = vmatpush1.msra.mxu0 0.0
    %685 = vmatprep.subr.mxu0 0.0
    %686 = vmatpush1.msra.mxu0 0.0
    %687 = vmatprep.subr.mxu0 0.0
    %688 = vmatpush1.msra.mxu0 0.0
    %689 = vmatprep.subr.mxu0 0.0
    %690 = vmatpush1.msra.mxu0 0.0
    %691 = vmatprep.subr.mxu0 0.0
    %692 = vmatpush1.msra.mxu0 0.0
    %693 = vmatprep.subr.mxu0 0.0
    %694 = vmatpush1.msra.mxu0 0.0
    %695 = vmatprep.subr.mxu0 0.0
    %696 = vmatpush1.msra.mxu0 0.0
    %697 = vmatprep.subr.mxu0 0.0
    %698 = vmatpush1.msra.mxu0 0.0
    %699 = vmatprep.subr.mxu0 0.0
    %700 = vmatpush1.msra.mxu0 0.0
    %701 = vmatprep.subr.mxu0 0.0
    %702 = vmatpush1.msra.mxu0 0.0
    %703 = vmatprep.subr.mxu0 0.0
    %704 = vmatpush1.msra.mxu0 0.0
    %705 = vmatprep.subr.mxu0 0.0
    %706 = vmatpush1.msra.mxu0 0.0
    %707 = vmatprep.subr.mxu0 0.0
    %708 = vmatpush1.msra.mxu0 0.0
    %709 = vmatprep.subr.mxu0 0.0
    %710 = vmatpush1.msra.mxu0 0.0
    %711 = vmatprep.subr.mxu0 0.0
    %712 = vmatpush1.msra.mxu0 0.0
    %713 = vmatprep.subr.mxu0 0.0
    %714 = vmatpush1.msra.mxu0 0.0
    %715 = vmatprep.subr.mxu0 0.0
    %716 = vmatpush1.msra.mxu0 0.0
    %717 = vmatprep.subr.mxu0 0.0
    %718 = vmatpush1.msra.mxu0 0.0
    %719 = vmatprep.subr.mxu0 0.0
    %720 = vmatpush1.msra.mxu0 0.0
    %721 = vmatprep.subr.mxu0 0.0
    %722 = vmatpush1.msra.mxu0 0.0
    %723 = vmatprep.subr.mxu0 0.0
    %724 = vmatpush1.msra.mxu0 0.0
    %725 = vmatprep.subr.mxu0 0.0
    %726 = vmatpush1.msra.mxu0 0.0
    %727 = vmatprep.subr.mxu0 0.0
    %728 = vmatpush1.msra.mxu0 0.0
    %729 = vmatprep.subr.mxu0 0.0
    %730 = vmatpush1.msra.mxu0 0.0
    %731 = vmatprep.subr.mxu0 0.0
    %732 = vmatpush1.msra.mxu0 0.0
    %733 = vmatprep.subr.mxu0 0.0
    %734 = vmatpush1.msra.mxu0 0.0
    %735 = vmatprep.subr.mxu0 0.0
    %736 = vmatpush1.msra.mxu0 0.0
    %737 = vmatprep.subr.mxu0 0.0
    %738 = vmatpush1.msra.mxu0 0.0
    %739 = vmatprep.mubr.f32.mxu0 0.0
    %740 = vmatmul.mubr.f32.gmra.mrb[0].mxu0 %v673
    %v741 = vpop.f32.mrb[0].mxu0
    %v742 = vadd.f32 0.0, %v741
    %v743 = vpop.f32.mrb[0].mxu0
    %744 = vdwg.mxu0
    %v746 = vrot.slane %v742, 1
    %v749 = vadd.f32 %v667, %v742
    %v750 = vadd.f32 %v668, %v746
    %v751 = vtanh.pop %v749
    %v752 = vtanh.pop %v750
    %753 = vst.msk [vmem:[#allocation4 + $0x6] sm:$0x1] %vm223, %v751
    %754 = vst.msk [vmem:[#allocation4 + $0xe] sm:$0x1] %vm223, %v752
    %v755 = vld [vmem:[#allocation3 + $0x7] sm:$0x1]
    %v756 = vld [vmem:[#allocation3 + $0xf] sm:$0x1]
    %v759 = vrot.slane %v752, 7
    %v760 = vsel %vm231, %v759, %v751
    %v761 = vsel %vm132, %v760, 0
    %763 = vmatprep.subr.mxu0 0.0
    %764 = vmatpush1.msra.mxu0 %v135
    %765 = vmatprep.subr.mxu0 0.0
    %766 = vmatpush1.msra.mxu0 %v136
    %767 = vmatprep.subr.mxu0 0.0
    %768 = vmatpush1.msra.mxu0 %v137
    %769 = vmatprep.subr.mxu0 0.0
    %770 = vmatpush1.msra.mxu0 %v138
    %771 = vmatprep.subr.mxu0 0.0
    %772 = vmatpush1.msra.mxu0 0.0
    %773 = vmatprep.subr.mxu0 0.0
    %774 = vmatpush1.msra.mxu0 0.0
    %775 = vmatprep.subr.mxu0 0.0
    %776 = vmatpush1.msra.mxu0 0.0
    %777 = vmatprep.subr.mxu0 0.0
    %778 = vmatpush1.msra.mxu0 0.0
    %779 = vmatprep.subr.mxu0 0.0
    %780 = vmatpush1.msra.mxu0 0.0
    %781 = vmatprep.subr.mxu0 0.0
    %782 = vmatpush1.msra.mxu0 0.0
    %783 = vmatprep.subr.mxu0 0.0
    %784 = vmatpush1.msra.mxu0 0.0
    %785 = vmatprep.subr.mxu0 0.0
    %786 = vmatpush1.msra.mxu0 0.0
    %787 = vmatprep.subr.mxu0 0.0
    %788 = vmatpush1.msra.mxu0 0.0
    %789 = vmatprep.subr.mxu0 0.0
    %790 = vmatpush1.msra.mxu0 0.0
    %791 = vmatprep.subr.mxu0 0.0
    %792 = vmatpush1.msra.mxu0 0.0
    %793 = vmatprep.subr.mxu0 0.0
    %794 = vmatpush1.msra.mxu0 0.0
    %795 = vmatprep.subr.mxu0 0.0
    %796 = vmatpush1.msra.mxu0 0.0
    %797 = vmatprep.subr.mxu0 0.0
    %798 = vmatpush1.msra.mxu0 0.0
    %799 = vmatprep.subr.mxu0 0.0
    %800 = vmatpush1.msra.mxu0 0.0
    %801 = vmatprep.subr.mxu0 0.0
    %802 = vmatpush1.msra.mxu0 0.0
    %803 = vmatprep.subr.mxu0 0.0
    %804 = vmatpush1.msra.mxu0 0.0
    %805 = vmatprep.subr.mxu0 0.0
    %806 = vmatpush1.msra.mxu0 0.0
    %807 = vmatprep.subr.mxu0 0.0
    %808 = vmatpush1.msra.mxu0 0.0
    %809 = vmatprep.subr.mxu0 0.0
    %810 = vmatpush1.msra.mxu0 0.0
    %811 = vmatprep.subr.mxu0 0.0
    %812 = vmatpush1.msra.mxu0 0.0
    %813 = vmatprep.subr.mxu0 0.0
    %814 = vmatpush1.msra.mxu0 0.0
    %815 = vmatprep.subr.mxu0 0.0
    %816 = vmatpush1.msra.mxu0 0.0
    %817 = vmatprep.subr.mxu0 0.0
    %818 = vmatpush1.msra.mxu0 0.0
    %819 = vmatprep.subr.mxu0 0.0
    %820 = vmatpush1.msra.mxu0 0.0
    %821 = vmatprep.subr.mxu0 0.0
    %822 = vmatpush1.msra.mxu0 0.0
    %823 = vmatprep.subr.mxu0 0.0
    %824 = vmatpush1.msra.mxu0 0.0
    %825 = vmatprep.subr.mxu0 0.0
    %826 = vmatpush1.msra.mxu0 0.0
    %827 = vmatprep.mubr.f32.mxu0 0.0
    %828 = vmatmul.mubr.f32.gmra.mrb[0].mxu0 %v761
    %v829 = vpop.f32.mrb[0].mxu0
    %v830 = vadd.f32 0.0, %v829
    %v831 = vpop.f32.mrb[0].mxu0
    %832 = vdwg.mxu0
    %v834 = vrot.slane %v830, 1
    %v837 = vadd.f32 %v755, %v830
    %v838 = vadd.f32 %v756, %v834
    %v839 = vtanh.pop %v837
    %v840 = vtanh.pop %v838
    %841 = vst.msk [vmem:[#allocation4 + $0x7] sm:$0x1] %vm223, %v839
    %842 = vst.msk [vmem:[#allocation4 + $0xf] sm:$0x1] %vm223, %v840
    %v845 = vrot.slane %v840, 7
    %v846 = vsel %vm231, %v845, %v839
    %vm848 = vcmask 254976
    %849 = vst.msk [vmem:[#allocation2] sm:$0x3] %vm848, %v846
    %v850 = vld [vmem:[#allocation4] sm:$0xff]
    %v851 = vld [vmem:[#allocation4 + $0x8] sm:$0xff]
    %v852 = vld [vmem:[%s5] sm:$0xff]
    %v853 = vld [vmem:[%s5 + $0x8] sm:$0xff]
    %v854 = vld [vmem:[%s5 + $0x10] sm:$0xff]
    %v855 = vld [vmem:[%s5 + $0x18] sm:$0xff]
    %v856 = vld [vmem:[%s6] sm:$0x1]
    %v858 = vlaneseq
    %v859 = vshrl.u32 %v858, 7
    %v860 = vsub.s32 0, %v859
    %v861 = vrot.slane %v856, %v860
    %v864 = vsel %vm132, %v850, 0
    %v867 = vsel %vm132, %v851, 0
    %869 = vmatprep.subr.mxu0 0.0
    %870 = vmatpush1.msra.mxu0 %v852
    %871 = vmatprep.subr.mxu0 0.0
    %872 = vmatpush1.msra.mxu0 %v853
    %873 = vmatprep.subr.mxu0 0.0
    %874 = vmatpush1.msra.mxu0 %v854
    %875 = vmatprep.subr.mxu0 0.0
    %876 = vmatpush1.msra.mxu0 %v855
    %877 = vmatprep.subr.mxu0 0.0
    %878 = vmatpush1.msra.mxu0 0.0
    %879 = vmatprep.subr.mxu0 0.0
    %880 = vmatpush1.msra.mxu0 0.0
    %881 = vmatprep.subr.mxu0 0.0
    %882 = vmatpush1.msra.mxu0 0.0
    %883 = vmatprep.subr.mxu0 0.0
    %884 = vmatpush1.msra.mxu0 0.0
    %885 = vmatprep.subr.mxu0 0.0
    %886 = vmatpush1.msra.mxu0 0.0
    %887 = vmatprep.subr.mxu0 0.0
    %888 = vmatpush1.msra.mxu0 0.0
    %889 = vmatprep.subr.mxu0 0.0
    %890 = vmatpush1.msra.mxu0 0.0
    %891 = vmatprep.subr.mxu0 0.0
    %892 = vmatpush1.msra.mxu0 0.0
    %893 = vmatprep.subr.mxu0 0.0
    %894 = vmatpush1.msra.mxu0 0.0
    %895 = vmatprep.subr.mxu0 0.0
    %896 = vmatpush1.msra.mxu0 0.0
    %897 = vmatprep.subr.mxu0 0.0
    %898 = vmatpush1.msra.mxu0 0.0
    %899 = vmatprep.subr.mxu0 0.0
    %900 = vmatpush1.msra.mxu0 0.0
    %901 = vmatprep.subr.mxu0 0.0
    %902 = vmatpush1.msra.mxu0 0.0
    %903 = vmatprep.subr.mxu0 0.0
    %904 = vmatpush1.msra.mxu0 0.0
    %905 = vmatprep.subr.mxu0 0.0
    %906 = vmatpush1.msra.mxu0 0.0
    %907 = vmatprep.subr.mxu0 0.0
    %908 = vmatpush1.msra.mxu0 0.0
    %909 = vmatprep.subr.mxu0 0.0
    %910 = vmatpush1.msra.mxu0 0.0
    %911 = vmatprep.subr.mxu0 0.0
    %912 = vmatpush1.msra.mxu0 0.0
    %913 = vmatprep.subr.mxu0 0.0
    %914 = vmatpush1.msra.mxu0 0.0
    %915 = vmatprep.subr.mxu0 0.0
    %916 = vmatpush1.msra.mxu0 0.0
    %917 = vmatprep.subr.mxu0 0.0
    %918 = vmatpush1.msra.mxu0 0.0
    %919 = vmatprep.subr.mxu0 0.0
    %920 = vmatpush1.msra.mxu0 0.0
    %921 = vmatprep.subr.mxu0 0.0
    %922 = vmatpush1.msra.mxu0 0.0
    %923 = vmatprep.subr.mxu0 0.0
    %924 = vmatpush1.msra.mxu0 0.0
    %925 = vmatprep.subr.mxu0 0.0
    %926 = vmatpush1.msra.mxu0 0.0
    %927 = vmatprep.subr.mxu0 0.0
    %928 = vmatpush1.msra.mxu0 0.0
    %929 = vmatprep.subr.mxu0 0.0
    %930 = vmatpush1.msra.mxu0 0.0
    %931 = vmatprep.subr.mxu0 0.0
    %932 = vmatpush1.msra.mxu0 0.0
    %933 = vmatprep.mubr.f32.mxu0 0.0
    %934 = vmatmul.mubr.f32.gmra.mrb[0].mxu0 %v864
    %v935 = vpop.f32.mrb[0].mxu0
    %v936 = vadd.f32 %v861, %v935
    %v937 = vpop.f32.mrb[0].mxu0
    %938 = vmatprep.mubr.f32.mxu0 0.0
    %939 = vmatmul.mubr.f32.gmra.mrb[0].mxu0 %v867
    %v940 = vpop.f32.mrb[0].mxu0
    %v941 = vadd.f32 %v861, %v940
    %v942 = vpop.f32.mrb[0].mxu0
    %943 = vdwg.mxu0
    %944 = vst.msk [vmem:[%s7] sm:$0xff] %vm46, %v936
    %945 = vst.msk [vmem:[%s7 + $0x8] sm:$0xff] %vm46, %v941
    // Predicated region
    $region34: #{_rnn_forward_impl.1} parent=1 // pred_check
      _
    $region35: #{_rnn_forward_impl.1} parent=1 // pred_check_branch
      %947 = sbr.rel (0) target = $region37
    $region36: #{_rnn_forward_impl.1} parent=1 // pred_region
      _
    $region37: #{_rnn_forward_impl.1} parent=1 // pred_fallthru
      _
    // Predicated region
    $region38: #{_rnn_forward_impl.1} parent=1 // pred_check
      _
    $region39: #{_rnn_forward_impl.1} parent=1 // pred_check_branch
      %949 = sbr.rel (0) target = $region41
    $region40: #{_rnn_forward_impl.1} parent=1 // pred_region
      %s951 = ssub.s32 256, 256
      %952 = vsyncadd [#allocation5], %s951
      %s953 = sshll.u32 [#allocation4], 4
      %s954 = int_to_ptr.vmem [resolvable:$true] %s953
      %959 = dma.vmem_to_hbm [thread:$0]  %s954, 256, %s8, [#allocation5], 128, 128, 8
    $region41: #{_rnn_forward_impl.1} parent=1 // pred_fallthru
      _
    // Predicated region
    $region42: #{_rnn_forward_impl.1} parent=1 // pred_check
      _
    $region43: #{_rnn_forward_impl.1} parent=1 // pred_check_branch
      %961 = sbr.rel (0) target = $region45
    $region44: #{_rnn_forward_impl.1} parent=1 // pred_region
      _
    $region45: #{_rnn_forward_impl.1} parent=1 // pred_fallthru
      _
    // Predicated region
    $region46: #{_rnn_forward_impl.1} parent=1 // pred_check
      _
    $region47: #{_rnn_forward_impl.1} parent=1 // pred_check_branch
      %963 = sbr.rel (0) target = $region49
    $region48: #{_rnn_forward_impl.1} parent=1 // pred_region
      %964 = dma.done [#allocation5], 256
    $region49: #{_rnn_forward_impl.1} parent=1 // pred_fallthru
      _
    %965 = vsyncpa [#allocation5], 1

</llo_original>
